<compile_context>
chip_gen: v5e
topology: v5e:2x2
jax: 0.10.0
libtpu: 0.0.40
codegen_flags: <defaults>
</compile_context>

<pallas_src>
import functools

import jax
import jax.numpy as jnp
from jax import lax
from jax.experimental import pallas as pl
from jax.experimental.pallas import tpu as pltpu


# --------------------------------------------------------------------------
# Fused ContextMAGNET kernel (single invocation, everything VMEM-resident)
# --------------------------------------------------------------------------
def _context_magnet_kernel(d_ref, w_ref, out_ref, *, T, B, I, H, N, heads,
                           slope, woffs, doffs):
    F = 2 * H            # concat hidden width == GAT feature width
    G = 8 * H            # fused gate width (both LSTM directions)
    HF = heads * F

    # ---- static slices of the two packed input slabs (zero runtime cost) ----
    x2   = d_ref[doffs["x"]:doffs["x"] + T * B, 0:2 * I]        # (T*B, 2I) = [x_t | x_{T-1-t}]
    emb  = d_ref[doffs["emb"]:doffs["emb"] + N, 0:I]            # (N, I)
    wih2 = w_ref[woffs["wih"]:woffs["wih"] + 2 * I, 0:G]        # (2I, 8H) block-diag over direction
    whh  = w_ref[woffs["whh"]:woffs["whh"] + F, 0:G]            # (2H, 8H) block-diag over direction
    b    = w_ref[woffs["b"]:woffs["b"] + 1, 0:G]                # (1, 8H)
    w1   = w_ref[woffs["w1"]:woffs["w1"] + I, 0:HF]             # (I, heads*F)
    w2   = w_ref[woffs["w2"]:woffs["w2"] + F, 0:HF]             # (F, heads*F)
    a12T = w_ref[woffs["a12"]:woffs["a12"] + 4 * heads, 0:HF]   # (4*heads, heads*F), both layers
    bias = w_ref[woffs["bias"]:woffs["bias"] + N, 0:N]          # (N, N) additive softmax mask

    # ---- biLSTM -------------------------------------------------------------
    # Input projection hoisted out of the recurrence; fwd/bwd time reversal is
    # folded into x2/wih2 so each step reads ONE contiguous (B, 8H) row block.
    # Kept as a register value (8 vregs) -> no VMEM scratch round trip.
    xproj = jnp.dot(x2, wih2, preferred_element_type=jnp.float32) + b   # (T*B, 8H)

    # Gate column layout: [f_f,f_b, i_f,i_b, o_f,o_b, g_f,g_b]; the gate that
    # multiplies the carry (f) sits at lane offset 0.
    h = jnp.zeros((B, F), jnp.float32)
    c = jnp.zeros((B, F), jnp.float32)
    # TODO(synk): whh could be kept MXU-resident via matmul_push_rhs/acc/pop;
    # left to Mosaic (loop-invariant RHS) pending a lower_as_mlir check.
    for t in range(T):                       # fully unrolled, static slice indices
        gates = (xproj[t * B:(t + 1) * B, :]
                 + jnp.dot(h, whh, preferred_element_type=jnp.float32))
        sg = jax.nn.sigmoid(gates[:, :6 * H])        # f, i, o (both directions)
        gg = jnp.tanh(gates[:, 6 * H:])              # g (both directions)
        c = sg[:, :F] * c + sg[:, F:2 * F] * gg      # f*c + i*g
        h = sg[:, 2 * F:3 * F] * jnp.tanh(c)         # o * tanh(c)
    # h == torch.cat([hidden[-2], hidden[-1]], dim=1)

    # ---- 2-layer multi-head GAT ---------------------------------------------
    inv_heads = jnp.float32(1.0 / heads)
    neg_slope = jnp.float32(slope)

    def gat_layer(h_nodes, w_all, a_off):
        wh_all = jnp.dot(h_nodes, w_all,
                         preferred_element_type=jnp.float32)          # (N, heads*F) lane-dense
        a1T = a12T[a_off:a_off + heads, :]                             # (heads, heads*F)
        a2T = a12T[a_off + heads:a_off + 2 * heads, :]                 # (heads, heads*F)
        # natural-LHS A @ B.T dots -> no in-kernel transposes
        fh  = lax.dot_general(wh_all, a1T, (((1,), (1,)), ((), ())),
                              preferred_element_type=jnp.float32)      # (N, heads)
        ghT = lax.dot_general(a2T, wh_all, (((1,), (1,)), ((), ())),
                              preferred_element_type=jnp.float32)      # (heads, N)
        acc = jnp.zeros((N, F), jnp.float32)
        for k in range(heads):                       # static unroll (heads=4)
            e = fh[:, k:k + 1] + ghT[k:k + 1, :]     # (N, N) attention logits
            e = jnp.where(e >= 0, e, neg_slope * e) + bias   # LeakyReLU + hoisted mask
            m = jnp.max(e, axis=1, keepdims=True)            # softmax dim=1
            p = jnp.exp(e - m)
            denom = jnp.sum(p, axis=1, keepdims=True)
            attn = p * pl.reciprocal(denom, approx=True)
            acc = acc + jnp.dot(attn, wh_all[:, k * F:(k + 1) * F],
                                preferred_element_type=jnp.float32)
        return jnp.tanh(acc * inv_heads)

    att = gat_layer(emb, w1, 0)                      # (N, 2H)
    att = gat_layer(att, w2, 2 * heads)              # (N, 2H)

    # ---- final projection: lstm_out @ att.T (intermediates never hit HBM) ----
    out_ref[...] = lax.dot_general(h, att, (((1,), (1,)), ((), ())),
                                   preferred_element_type=jnp.float32)


# --------------------------------------------------------------------------
# Wrapper-side packing helpers (layout plumbing only, done once in XLA)
# --------------------------------------------------------------------------
def _pad2(a, rows, cols):
    return jnp.pad(a, ((0, rows - a.shape[0]), (0, cols - a.shape[1])))


def _pack_rows(blocks, width):
    """Stack 2-D blocks vertically into one lane-dense slab.

    Each block's rows are padded to a multiple of 8 so every block starts on a
    sublane-group boundary; returns the slab and static row offsets.
    """
    offs, parts, row = {}, [], 0
    for name, arr in blocks:
        rp = ((arr.shape[0] + 7) // 8) * 8
        offs[name] = row
        parts.append(_pad2(arr, rp, width))
        row += rp
    return jnp.concatenate(parts, axis=0), offs


def _prepare_kernel_params(params):
    lstm = params["lstm"]
    H = lstm["whh_f"].shape[0]
    I = lstm["wih_f"].shape[0]
    F = 2 * H
    heads = params["gat1"]["W"].shape[0]
    N = params["adjacency"].shape[0]

    def gate(w, idx):  # torch gate order is [i, f, g, o]
        return w[..., idx * H:(idx + 1) * H]

    # kernel gate order [f, i, o, g]: f (multiplied against the carry) at lane
    # offset 0; sigmoid gates (f|i|o) contiguous, g last for the single tanh.
    order = (1, 0, 3, 2)

    z_ih = jnp.zeros((I, H), jnp.float32)
    z_hh = jnp.zeros((H, H), jnp.float32)
    wih_blocks, whh_blocks, b_blocks = [], [], []
    for idx in order:
        # forward direction reads x_t (rows 0:I), backward reads x_{T-1-t} (rows I:2I)
        wih_blocks.append(jnp.concatenate([gate(lstm["wih_f"], idx), z_ih], axis=0))
        wih_blocks.append(jnp.concatenate([z_ih, gate(lstm["wih_b"], idx)], axis=0))
        whh_blocks.append(jnp.concatenate([gate(lstm["whh_f"], idx), z_hh], axis=0))
        whh_blocks.append(jnp.concatenate([z_hh, gate(lstm["whh_b"], idx)], axis=0))
        b_blocks.append(gate(lstm["b_f"], idx))
        b_blocks.append(gate(lstm["b_b"], idx))
    wih2 = jnp.concatenate(wih_blocks, axis=1)     # (2I, 8H)
    whh = jnp.concatenate(whh_blocks, axis=1)      # (2H, 8H)
    b = jnp.concatenate(b_blocks, axis=1)          # (1, 8H)

    def w_all(g):                                  # (heads, f_in, F) -> (f_in, heads*F)
        W = g["W"]
        return jnp.transpose(W, (1, 0, 2)).reshape(W.shape[1], heads * F)

    def a_rows(a):                                 # (heads, F) -> (heads, heads*F) block rows
        eye = jnp.eye(heads, dtype=jnp.float32)
        return (eye[:, :, None] * a[:, None, :]).reshape(heads, heads * F)

    a12T = jnp.concatenate(
        [a_rows(params["gat1"]["a1"]), a_rows(params["gat1"]["a2"]),
         a_rows(params["gat2"]["a1"]), a_rows(params["gat2"]["a2"])], axis=0)  # (4*heads, heads*F)

    # softmax mask folded into a single additive bias, hoisted out of both layers
    bias = jnp.where(params["adjacency"] > 0, 0.0, -9e15).astype(jnp.float32)

    width = max(8 * H, heads * F, N)
    wslab, woffs = _pack_rows(
        [("wih", wih2), ("whh", whh), ("b", b),
         ("w1", w_all(params["gat1"])), ("w2", w_all(params["gat2"])),
         ("a12", a12T), ("bias", bias)], width)
    return wslab, woffs


# --------------------------------------------------------------------------
# Full ContextMAGNET forward (single pallas_call, 2 input DMAs + 1 output)
# --------------------------------------------------------------------------
def context_magnet_forward(features, label_embedding, params):
    # TODO(synk): dropout (p=0.5) is implemented as identity (eval-mode semantics).
    B, T, I = features.shape
    H = params["lstm"]["whh_f"].shape[0]
    heads = params["gat1"]["W"].shape[0]
    N = label_embedding.shape[0]

    # Pad batch to a full sublane group (multiple of 8); sliced off at the end.
    B_pad = ((B + 7) // 8) * 8
    if B_pad != B:
        features = jnp.pad(features, ((0, B_pad - B), (0, 0), (0, 0)))

    # Time-major input with the backward-direction reversal folded in:
    # row (t*B + b) = [x_{t,b} | x_{T-1-t,b}].
    x_tbi = jnp.transpose(features, (1, 0, 2))                       # (T, B_pad, I)
    x2_flat = jnp.concatenate([x_tbi, x_tbi[::-1]], axis=-1).reshape(T * B_pad, 2 * I)

    wslab, woffs = _prepare_kernel_params(params)
    dslab, doffs = _pack_rows([("x", x2_flat), ("emb", label_embedding)],
                              max(2 * I, I))

    kernel = functools.partial(
        _context_magnet_kernel, T=T, B=B_pad, I=I, H=H, N=N, heads=heads,
        slope=float(params["slope"]), woffs=woffs, doffs=doffs)
    vmem = pl.BlockSpec(memory_space=pltpu.MemorySpace.VMEM)
    # NOTE: grid-less single invocation (one TensorCore). For production batch
    # sizes add a batch-tiled grid axis (dimension_semantics=("parallel",)) to
    # use v7x's second core, and re-derive the VMEM budget (64 MiB on v7x).
    out = pl.pallas_call(
        kernel,
        out_shape=jax.ShapeDtypeStruct((B_pad, N), jnp.float32),
        in_specs=[vmem, vmem],
        out_specs=vmem,
    )(dslab, wslab)
    return out[:B]


# --------------------------------------------------------------------------
# Deterministic parameter construction (PyTorch-style uniform init)
# --------------------------------------------------------------------------
def init_params(key, input_size, hidden_size, num_labels, heads, slope):
    H, I = hidden_size, input_size
    F = 2 * hidden_size
    keys = jax.random.split(key, 16)

    def u(k, shape, fan_in):
        bound = 1.0 / (fan_in ** 0.5)
        return jax.random.uniform(k, shape, jnp.float32, -bound, bound)

    lstm = {
        "wih_f": u(keys[0], (I, 4 * H), H),
        "whh_f": u(keys[1], (H, 4 * H), H),
        "b_f":   u(keys[2], (1, 4 * H), H) + u(keys[3], (1, 4 * H), H),
        "wih_b": u(keys[4], (I, 4 * H), H),
        "whh_b": u(keys[5], (H, 4 * H), H),
        "b_b":   u(keys[6], (1, 4 * H), H) + u(keys[7], (1, 4 * H), H),
    }
    gat1 = {
        "W":  u(keys[8], (heads, I, F), I),
        "a1": u(keys[9], (heads, F), 2 * F),
        "a2": u(keys[10], (heads, F), 2 * F),
    }
    gat2 = {
        "W":  u(keys[11], (heads, F, F), F),
        "a1": u(keys[12], (heads, F), 2 * F),
        "a2": u(keys[13], (heads, F), 2 * F),
    }
    adj_rand = jax.random.uniform(keys[14], (num_labels, num_labels))
    # Invariant: adjacency includes self-loops (diagonal = 1), so no softmax
    # row is ever fully masked by the -9e15 fill.
    adjacency = jnp.where(adj_rand > 0.5, 1.0, 0.0) + jnp.eye(num_labels)
    adjacency = jnp.clip(adjacency, 0.0, 1.0).astype(jnp.float32)
    return {"lstm": lstm, "gat1": gat1, "gat2": gat2,
            "adjacency": adjacency, "slope": slope}


# --------------------------------------------------------------------------
# Pure-JAX reference (same math, natural parameter layout) for correctness
# --------------------------------------------------------------------------
def reference_forward(features, label_embedding, params):
    B = features.shape[0]
    H = params["lstm"]["whh_f"].shape[0]
    x_tbi = jnp.transpose(features, (1, 0, 2))

    def run_dir(xs, Wi, Wh, b):
        h = jnp.zeros((B, H), jnp.float32)
        c = jnp.zeros((B, H), jnp.float32)
        for t in range(xs.shape[0]):
            gates = xs[t] @ Wi + h @ Wh + b
            i = jax.nn.sigmoid(gates[:, :H])
            f = jax.nn.sigmoid(gates[:, H:2 * H])
            g = jnp.tanh(gates[:, 2 * H:3 * H])
            o = jax.nn.sigmoid(gates[:, 3 * H:])
            c = f * c + i * g
            h = o * jnp.tanh(c)
        return h

    p = params["lstm"]
    h_f = run_dir(x_tbi, p["wih_f"], p["whh_f"], p["b_f"])
    h_b = run_dir(x_tbi[::-1], p["wih_b"], p["whh_b"], p["b_b"])
    out = jnp.concatenate([h_f, h_b], axis=1)

    def mh_gat(h, adj, W, a1, a2, slope):
        heads = W.shape[0]
        acc = 0.0
        for k in range(heads):
            Wh = h @ W[k]
            f = Wh @ a1[k]                       # (N,)
            g = Wh @ a2[k]                       # (N,)
            e = f[:, None] + g[None, :]
            e = jnp.where(e >= 0, e, slope * e)
            masked = jnp.where(adj > 0, e, -9e15)
            attn = jax.nn.softmax(masked, axis=1)
            acc = acc + attn @ Wh
        return jnp.tanh(acc / heads)

    adj, slope = params["adjacency"], params["slope"]
    att = mh_gat(label_embedding, adj, params["gat1"]["W"],
                 params["gat1"]["a1"], params["gat1"]["a2"], slope)
    att = mh_gat(att, adj, params["gat2"]["W"],
                 params["gat2"]["a1"], params["gat2"]["a2"], slope)
    return out @ att.T


if __name__ == "__main__":
    B, T, I = 2, 8, 16        # batch, seq, input_size
    H = 16                    # hidden_size  -> GAT feature dim = 2H = 32
    N = 8                     # number of labels (graph nodes)
    heads = 4                 # heads * 2H = 128 -> one full vreg lane width
    slope = 0.01

    key = jax.random.PRNGKey(0)
    k_feat, k_emb, k_par = jax.random.split(key, 3)
    features = jax.random.normal(k_feat, (B, T, I), jnp.float32)
    label_embedding = jax.random.normal(k_emb, (N, I), jnp.float32)
    params = init_params(k_par, I, H, N, heads, slope)

    out = context_magnet_forward(features, label_embedding, params)
    out = jax.block_until_ready(out)

    ref = reference_forward(features, label_embedding, params)
    assert out.shape == (B, N)
    assert jnp.allclose(out, ref, rtol=2e-3, atol=2e-3)

    print("KERNEL_OK")
</pallas_src>

<mosaic_0001>
module attributes {stable_mosaic.version = 11 : i64} {
  func.func @_context_magnet_kernel(%arg0: memref<72x32xf32, #tpu.memory_space<vmem>>, %arg1: memref<144x128xf32, #tpu.memory_space<vmem>>, %arg2: memref<8x8xf32, #tpu.memory_space<vmem>>) attributes {dimension_semantics = [], scalar_prefetch = 0 : i64, scratch_operands = 0 : i64, tpu.core_type = #tpu.core_type<tc>} {
    %c0 = arith.constant 0 : index
    %c0_0 = arith.constant 0 : index
    %0 = vector.load %arg0[%c0, %c0_0] : memref<72x32xf32, #tpu.memory_space<vmem>>, vector<64x32xf32>
    %c64 = arith.constant 64 : index
    %c0_1 = arith.constant 0 : index
    %1 = vector.load %arg0[%c64, %c0_1] : memref<72x32xf32, #tpu.memory_space<vmem>>, vector<8x16xf32>
    %c0_2 = arith.constant 0 : index
    %c0_3 = arith.constant 0 : index
    %2 = vector.load %arg1[%c0_2, %c0_3] : memref<144x128xf32, #tpu.memory_space<vmem>>, vector<32x128xf32>
    %c32 = arith.constant 32 : index
    %c0_4 = arith.constant 0 : index
    %3 = vector.load %arg1[%c32, %c0_4] : memref<144x128xf32, #tpu.memory_space<vmem>>, vector<32x128xf32>
    %c64_5 = arith.constant 64 : index
    %c0_6 = arith.constant 0 : index
    %4 = vector.load %arg1[%c64_5, %c0_6] : memref<144x128xf32, #tpu.memory_space<vmem>>, vector<1x128xf32>
    %c72 = arith.constant 72 : index
    %c0_7 = arith.constant 0 : index
    %5 = vector.load %arg1[%c72, %c0_7] : memref<144x128xf32, #tpu.memory_space<vmem>>, vector<16x128xf32>
    %c88 = arith.constant 88 : index
    %c0_8 = arith.constant 0 : index
    %6 = vector.load %arg1[%c88, %c0_8] : memref<144x128xf32, #tpu.memory_space<vmem>>, vector<32x128xf32>
    %c120 = arith.constant 120 : index
    %c0_9 = arith.constant 0 : index
    %7 = vector.load %arg1[%c120, %c0_9] : memref<144x128xf32, #tpu.memory_space<vmem>>, vector<16x128xf32>
    %c136 = arith.constant 136 : index
    %c0_10 = arith.constant 0 : index
    %8 = vector.load %arg1[%c136, %c0_10] : memref<144x128xf32, #tpu.memory_space<vmem>>, vector<8x8xf32>
    %cst = arith.constant dense<0.000000e+00> : vector<64x128xf32>
    %9 = tpu.matmul %0, %2, %cst {dimension_numbers = #tpu.dot_dimension_numbers<[1], [0], [0], [1], [0, 0, 1, 1], [], []>} : vector<64x32xf32>, vector<32x128xf32>, vector<64x128xf32> -> vector<64x128xf32>
    %10 = vector.broadcast %4 : vector<1x128xf32> to vector<64x128xf32>
    %11 = arith.addf %9, %10 : vector<64x128xf32>
    %cst_11 = arith.constant 0.000000e+00 : f32
    %12 = vector.broadcast %cst_11 : f32 to vector<8x32xf32>
    %cst_12 = arith.constant 0.000000e+00 : f32
    %13 = vector.broadcast %cst_12 : f32 to vector<8x32xf32>
    %14 = vector.extract_strided_slice %11 {offsets = [0, 0], sizes = [8, 128], strides = [1, 1]} : vector<64x128xf32> to vector<8x128xf32>
    %cst_13 = arith.constant dense<0.000000e+00> : vector<8x128xf32>
    %15 = tpu.matmul %12, %3, %cst_13 {dimension_numbers = #tpu.dot_dimension_numbers<[1], [0], [0], [1], [0, 0, 1, 1], [], []>} : vector<8x32xf32>, vector<32x128xf32>, vector<8x128xf32> -> vector<8x128xf32>
    %16 = arith.addf %14, %15 : vector<8x128xf32>
    %17 = vector.extract_strided_slice %16 {offsets = [0, 0], sizes = [8, 96], strides = [1, 1]} : vector<8x128xf32> to vector<8x96xf32>
    %18 = arith.negf %17 : vector<8x96xf32>
    %19 = math.exp %18 : vector<8x96xf32>
    %cst_14 = arith.constant 1.000000e+00 : f32
    %20 = vector.broadcast %cst_14 : f32 to vector<8x96xf32>
    %21 = arith.addf %20, %19 : vector<8x96xf32>
    %22 = arith.divf %20, %21 : vector<8x96xf32>
    %23 = vector.extract_strided_slice %16 {offsets = [0, 96], sizes = [8, 32], strides = [1, 1]} : vector<8x128xf32> to vector<8x32xf32>
    %24 = math.tanh %23 : vector<8x32xf32>
    %25 = vector.extract_strided_slice %22 {offsets = [0, 0], sizes = [8, 32], strides = [1, 1]} : vector<8x96xf32> to vector<8x32xf32>
    %26 = arith.mulf %25, %13 : vector<8x32xf32>
    %27 = vector.extract_strided_slice %22 {offsets = [0, 32], sizes = [8, 32], strides = [1, 1]} : vector<8x96xf32> to vector<8x32xf32>
    %28 = arith.mulf %27, %24 : vector<8x32xf32>
    %29 = arith.addf %26, %28 : vector<8x32xf32>
    %30 = vector.extract_strided_slice %22 {offsets = [0, 64], sizes = [8, 32], strides = [1, 1]} : vector<8x96xf32> to vector<8x32xf32>
    %31 = math.tanh %29 : vector<8x32xf32>
    %32 = arith.mulf %30, %31 : vector<8x32xf32>
    %33 = vector.extract_strided_slice %11 {offsets = [8, 0], sizes = [8, 128], strides = [1, 1]} : vector<64x128xf32> to vector<8x128xf32>
    %cst_15 = arith.constant dense<0.000000e+00> : vector<8x128xf32>
    %34 = tpu.matmul %32, %3, %cst_15 {dimension_numbers = #tpu.dot_dimension_numbers<[1], [0], [0], [1], [0, 0, 1, 1], [], []>} : vector<8x32xf32>, vector<32x128xf32>, vector<8x128xf32> -> vector<8x128xf32>
    %35 = arith.addf %33, %34 : vector<8x128xf32>
    %36 = vector.extract_strided_slice %35 {offsets = [0, 0], sizes = [8, 96], strides = [1, 1]} : vector<8x128xf32> to vector<8x96xf32>
    %37 = arith.negf %36 : vector<8x96xf32>
    %38 = math.exp %37 : vector<8x96xf32>
    %cst_16 = arith.constant 1.000000e+00 : f32
    %39 = vector.broadcast %cst_16 : f32 to vector<8x96xf32>
    %40 = arith.addf %39, %38 : vector<8x96xf32>
    %41 = arith.divf %39, %40 : vector<8x96xf32>
    %42 = vector.extract_strided_slice %35 {offsets = [0, 96], sizes = [8, 32], strides = [1, 1]} : vector<8x128xf32> to vector<8x32xf32>
    %43 = math.tanh %42 : vector<8x32xf32>
    %44 = vector.extract_strided_slice %41 {offsets = [0, 0], sizes = [8, 32], strides = [1, 1]} : vector<8x96xf32> to vector<8x32xf32>
    %45 = arith.mulf %44, %29 : vector<8x32xf32>
    %46 = vector.extract_strided_slice %41 {offsets = [0, 32], sizes = [8, 32], strides = [1, 1]} : vector<8x96xf32> to vector<8x32xf32>
    %47 = arith.mulf %46, %43 : vector<8x32xf32>
    %48 = arith.addf %45, %47 : vector<8x32xf32>
    %49 = vector.extract_strided_slice %41 {offsets = [0, 64], sizes = [8, 32], strides = [1, 1]} : vector<8x96xf32> to vector<8x32xf32>
    %50 = math.tanh %48 : vector<8x32xf32>
    %51 = arith.mulf %49, %50 : vector<8x32xf32>
    %52 = vector.extract_strided_slice %11 {offsets = [16, 0], sizes = [8, 128], strides = [1, 1]} : vector<64x128xf32> to vector<8x128xf32>
    %cst_17 = arith.constant dense<0.000000e+00> : vector<8x128xf32>
    %53 = tpu.matmul %51, %3, %cst_17 {dimension_numbers = #tpu.dot_dimension_numbers<[1], [0], [0], [1], [0, 0, 1, 1], [], []>} : vector<8x32xf32>, vector<32x128xf32>, vector<8x128xf32> -> vector<8x128xf32>
    %54 = arith.addf %52, %53 : vector<8x128xf32>
    %55 = vector.extract_strided_slice %54 {offsets = [0, 0], sizes = [8, 96], strides = [1, 1]} : vector<8x128xf32> to vector<8x96xf32>
    %56 = arith.negf %55 : vector<8x96xf32>
    %57 = math.exp %56 : vector<8x96xf32>
    %cst_18 = arith.constant 1.000000e+00 : f32
    %58 = vector.broadcast %cst_18 : f32 to vector<8x96xf32>
    %59 = arith.addf %58, %57 : vector<8x96xf32>
    %60 = arith.divf %58, %59 : vector<8x96xf32>
    %61 = vector.extract_strided_slice %54 {offsets = [0, 96], sizes = [8, 32], strides = [1, 1]} : vector<8x128xf32> to vector<8x32xf32>
    %62 = math.tanh %61 : vector<8x32xf32>
    %63 = vector.extract_strided_slice %60 {offsets = [0, 0], sizes = [8, 32], strides = [1, 1]} : vector<8x96xf32> to vector<8x32xf32>
    %64 = arith.mulf %63, %48 : vector<8x32xf32>
    %65 = vector.extract_strided_slice %60 {offsets = [0, 32], sizes = [8, 32], strides = [1, 1]} : vector<8x96xf32> to vector<8x32xf32>
    %66 = arith.mulf %65, %62 : vector<8x32xf32>
    %67 = arith.addf %64, %66 : vector<8x32xf32>
    %68 = vector.extract_strided_slice %60 {offsets = [0, 64], sizes = [8, 32], strides = [1, 1]} : vector<8x96xf32> to vector<8x32xf32>
    %69 = math.tanh %67 : vector<8x32xf32>
    %70 = arith.mulf %68, %69 : vector<8x32xf32>
    %71 = vector.extract_strided_slice %11 {offsets = [24, 0], sizes = [8, 128], strides = [1, 1]} : vector<64x128xf32> to vector<8x128xf32>
    %cst_19 = arith.constant dense<0.000000e+00> : vector<8x128xf32>
    %72 = tpu.matmul %70, %3, %cst_19 {dimension_numbers = #tpu.dot_dimension_numbers<[1], [0], [0], [1], [0, 0, 1, 1], [], []>} : vector<8x32xf32>, vector<32x128xf32>, vector<8x128xf32> -> vector<8x128xf32>
    %73 = arith.addf %71, %72 : vector<8x128xf32>
    %74 = vector.extract_strided_slice %73 {offsets = [0, 0], sizes = [8, 96], strides = [1, 1]} : vector<8x128xf32> to vector<8x96xf32>
    %75 = arith.negf %74 : vector<8x96xf32>
    %76 = math.exp %75 : vector<8x96xf32>
    %cst_20 = arith.constant 1.000000e+00 : f32
    %77 = vector.broadcast %cst_20 : f32 to vector<8x96xf32>
    %78 = arith.addf %77, %76 : vector<8x96xf32>
    %79 = arith.divf %77, %78 : vector<8x96xf32>
    %80 = vector.extract_strided_slice %73 {offsets = [0, 96], sizes = [8, 32], strides = [1, 1]} : vector<8x128xf32> to vector<8x32xf32>
    %81 = math.tanh %80 : vector<8x32xf32>
    %82 = vector.extract_strided_slice %79 {offsets = [0, 0], sizes = [8, 32], strides = [1, 1]} : vector<8x96xf32> to vector<8x32xf32>
    %83 = arith.mulf %82, %67 : vector<8x32xf32>
    %84 = vector.extract_strided_slice %79 {offsets = [0, 32], sizes = [8, 32], strides = [1, 1]} : vector<8x96xf32> to vector<8x32xf32>
    %85 = arith.mulf %84, %81 : vector<8x32xf32>
    %86 = arith.addf %83, %85 : vector<8x32xf32>
    %87 = vector.extract_strided_slice %79 {offsets = [0, 64], sizes = [8, 32], strides = [1, 1]} : vector<8x96xf32> to vector<8x32xf32>
    %88 = math.tanh %86 : vector<8x32xf32>
    %89 = arith.mulf %87, %88 : vector<8x32xf32>
    %90 = vector.extract_strided_slice %11 {offsets = [32, 0], sizes = [8, 128], strides = [1, 1]} : vector<64x128xf32> to vector<8x128xf32>
    %cst_21 = arith.constant dense<0.000000e+00> : vector<8x128xf32>
    %91 = tpu.matmul %89, %3, %cst_21 {dimension_numbers = #tpu.dot_dimension_numbers<[1], [0], [0], [1], [0, 0, 1, 1], [], []>} : vector<8x32xf32>, vector<32x128xf32>, vector<8x128xf32> -> vector<8x128xf32>
    %92 = arith.addf %90, %91 : vector<8x128xf32>
    %93 = vector.extract_strided_slice %92 {offsets = [0, 0], sizes = [8, 96], strides = [1, 1]} : vector<8x128xf32> to vector<8x96xf32>
    %94 = arith.negf %93 : vector<8x96xf32>
    %95 = math.exp %94 : vector<8x96xf32>
    %cst_22 = arith.constant 1.000000e+00 : f32
    %96 = vector.broadcast %cst_22 : f32 to vector<8x96xf32>
    %97 = arith.addf %96, %95 : vector<8x96xf32>
    %98 = arith.divf %96, %97 : vector<8x96xf32>
    %99 = vector.extract_strided_slice %92 {offsets = [0, 96], sizes = [8, 32], strides = [1, 1]} : vector<8x128xf32> to vector<8x32xf32>
    %100 = math.tanh %99 : vector<8x32xf32>
    %101 = vector.extract_strided_slice %98 {offsets = [0, 0], sizes = [8, 32], strides = [1, 1]} : vector<8x96xf32> to vector<8x32xf32>
    %102 = arith.mulf %101, %86 : vector<8x32xf32>
    %103 = vector.extract_strided_slice %98 {offsets = [0, 32], sizes = [8, 32], strides = [1, 1]} : vector<8x96xf32> to vector<8x32xf32>
    %104 = arith.mulf %103, %100 : vector<8x32xf32>
    %105 = arith.addf %102, %104 : vector<8x32xf32>
    %106 = vector.extract_strided_slice %98 {offsets = [0, 64], sizes = [8, 32], strides = [1, 1]} : vector<8x96xf32> to vector<8x32xf32>
    %107 = math.tanh %105 : vector<8x32xf32>
    %108 = arith.mulf %106, %107 : vector<8x32xf32>
    %109 = vector.extract_strided_slice %11 {offsets = [40, 0], sizes = [8, 128], strides = [1, 1]} : vector<64x128xf32> to vector<8x128xf32>
    %cst_23 = arith.constant dense<0.000000e+00> : vector<8x128xf32>
    %110 = tpu.matmul %108, %3, %cst_23 {dimension_numbers = #tpu.dot_dimension_numbers<[1], [0], [0], [1], [0, 0, 1, 1], [], []>} : vector<8x32xf32>, vector<32x128xf32>, vector<8x128xf32> -> vector<8x128xf32>
    %111 = arith.addf %109, %110 : vector<8x128xf32>
    %112 = vector.extract_strided_slice %111 {offsets = [0, 0], sizes = [8, 96], strides = [1, 1]} : vector<8x128xf32> to vector<8x96xf32>
    %113 = arith.negf %112 : vector<8x96xf32>
    %114 = math.exp %113 : vector<8x96xf32>
    %cst_24 = arith.constant 1.000000e+00 : f32
    %115 = vector.broadcast %cst_24 : f32 to vector<8x96xf32>
    %116 = arith.addf %115, %114 : vector<8x96xf32>
    %117 = arith.divf %115, %116 : vector<8x96xf32>
    %118 = vector.extract_strided_slice %111 {offsets = [0, 96], sizes = [8, 32], strides = [1, 1]} : vector<8x128xf32> to vector<8x32xf32>
    %119 = math.tanh %118 : vector<8x32xf32>
    %120 = vector.extract_strided_slice %117 {offsets = [0, 0], sizes = [8, 32], strides = [1, 1]} : vector<8x96xf32> to vector<8x32xf32>
    %121 = arith.mulf %120, %105 : vector<8x32xf32>
    %122 = vector.extract_strided_slice %117 {offsets = [0, 32], sizes = [8, 32], strides = [1, 1]} : vector<8x96xf32> to vector<8x32xf32>
    %123 = arith.mulf %122, %119 : vector<8x32xf32>
    %124 = arith.addf %121, %123 : vector<8x32xf32>
    %125 = vector.extract_strided_slice %117 {offsets = [0, 64], sizes = [8, 32], strides = [1, 1]} : vector<8x96xf32> to vector<8x32xf32>
    %126 = math.tanh %124 : vector<8x32xf32>
    %127 = arith.mulf %125, %126 : vector<8x32xf32>
    %128 = vector.extract_strided_slice %11 {offsets = [48, 0], sizes = [8, 128], strides = [1, 1]} : vector<64x128xf32> to vector<8x128xf32>
    %cst_25 = arith.constant dense<0.000000e+00> : vector<8x128xf32>
    %129 = tpu.matmul %127, %3, %cst_25 {dimension_numbers = #tpu.dot_dimension_numbers<[1], [0], [0], [1], [0, 0, 1, 1], [], []>} : vector<8x32xf32>, vector<32x128xf32>, vector<8x128xf32> -> vector<8x128xf32>
    %130 = arith.addf %128, %129 : vector<8x128xf32>
    %131 = vector.extract_strided_slice %130 {offsets = [0, 0], sizes = [8, 96], strides = [1, 1]} : vector<8x128xf32> to vector<8x96xf32>
    %132 = arith.negf %131 : vector<8x96xf32>
    %133 = math.exp %132 : vector<8x96xf32>
    %cst_26 = arith.constant 1.000000e+00 : f32
    %134 = vector.broadcast %cst_26 : f32 to vector<8x96xf32>
    %135 = arith.addf %134, %133 : vector<8x96xf32>
    %136 = arith.divf %134, %135 : vector<8x96xf32>
    %137 = vector.extract_strided_slice %130 {offsets = [0, 96], sizes = [8, 32], strides = [1, 1]} : vector<8x128xf32> to vector<8x32xf32>
    %138 = math.tanh %137 : vector<8x32xf32>
    %139 = vector.extract_strided_slice %136 {offsets = [0, 0], sizes = [8, 32], strides = [1, 1]} : vector<8x96xf32> to vector<8x32xf32>
    %140 = arith.mulf %139, %124 : vector<8x32xf32>
    %141 = vector.extract_strided_slice %136 {offsets = [0, 32], sizes = [8, 32], strides = [1, 1]} : vector<8x96xf32> to vector<8x32xf32>
    %142 = arith.mulf %141, %138 : vector<8x32xf32>
    %143 = arith.addf %140, %142 : vector<8x32xf32>
    %144 = vector.extract_strided_slice %136 {offsets = [0, 64], sizes = [8, 32], strides = [1, 1]} : vector<8x96xf32> to vector<8x32xf32>
    %145 = math.tanh %143 : vector<8x32xf32>
    %146 = arith.mulf %144, %145 : vector<8x32xf32>
    %147 = vector.extract_strided_slice %11 {offsets = [56, 0], sizes = [8, 128], strides = [1, 1]} : vector<64x128xf32> to vector<8x128xf32>
    %cst_27 = arith.constant dense<0.000000e+00> : vector<8x128xf32>
    %148 = tpu.matmul %146, %3, %cst_27 {dimension_numbers = #tpu.dot_dimension_numbers<[1], [0], [0], [1], [0, 0, 1, 1], [], []>} : vector<8x32xf32>, vector<32x128xf32>, vector<8x128xf32> -> vector<8x128xf32>
    %149 = arith.addf %147, %148 : vector<8x128xf32>
    %150 = vector.extract_strided_slice %149 {offsets = [0, 0], sizes = [8, 96], strides = [1, 1]} : vector<8x128xf32> to vector<8x96xf32>
    %151 = arith.negf %150 : vector<8x96xf32>
    %152 = math.exp %151 : vector<8x96xf32>
    %cst_28 = arith.constant 1.000000e+00 : f32
    %153 = vector.broadcast %cst_28 : f32 to vector<8x96xf32>
    %154 = arith.addf %153, %152 : vector<8x96xf32>
    %155 = arith.divf %153, %154 : vector<8x96xf32>
    %156 = vector.extract_strided_slice %149 {offsets = [0, 96], sizes = [8, 32], strides = [1, 1]} : vector<8x128xf32> to vector<8x32xf32>
    %157 = math.tanh %156 : vector<8x32xf32>
    %158 = vector.extract_strided_slice %155 {offsets = [0, 0], sizes = [8, 32], strides = [1, 1]} : vector<8x96xf32> to vector<8x32xf32>
    %159 = arith.mulf %158, %143 : vector<8x32xf32>
    %160 = vector.extract_strided_slice %155 {offsets = [0, 32], sizes = [8, 32], strides = [1, 1]} : vector<8x96xf32> to vector<8x32xf32>
    %161 = arith.mulf %160, %157 : vector<8x32xf32>
    %162 = arith.addf %159, %161 : vector<8x32xf32>
    %163 = vector.extract_strided_slice %155 {offsets = [0, 64], sizes = [8, 32], strides = [1, 1]} : vector<8x96xf32> to vector<8x32xf32>
    %164 = math.tanh %162 : vector<8x32xf32>
    %165 = arith.mulf %163, %164 : vector<8x32xf32>
    %cst_29 = arith.constant dense<0.000000e+00> : vector<8x128xf32>
    %166 = tpu.matmul %1, %5, %cst_29 {dimension_numbers = #tpu.dot_dimension_numbers<[1], [0], [0], [1], [0, 0, 1, 1], [], []>} : vector<8x16xf32>, vector<16x128xf32>, vector<8x128xf32> -> vector<8x128xf32>
    %167 = vector.extract_strided_slice %7 {offsets = [0, 0], sizes = [4, 128], strides = [1, 1]} : vector<16x128xf32> to vector<4x128xf32>
    %168 = vector.extract_strided_slice %7 {offsets = [4, 0], sizes = [4, 128], strides = [1, 1]} : vector<16x128xf32> to vector<4x128xf32>
    %cst_30 = arith.constant dense<0.000000e+00> : vector<8x4xf32>
    %169 = tpu.matmul %166, %167, %cst_30 {dimension_numbers = #tpu.dot_dimension_numbers<[1], [1], [0], [0], [0, 0, 1, 0], [], []>} : vector<8x128xf32>, vector<4x128xf32>, vector<8x4xf32> -> vector<8x4xf32>
    %cst_31 = arith.constant dense<0.000000e+00> : vector<4x8xf32>
    %170 = tpu.matmul %168, %166, %cst_31 {dimension_numbers = #tpu.dot_dimension_numbers<[1], [1], [0], [0], [0, 0, 1, 0], [], []>} : vector<4x128xf32>, vector<8x128xf32>, vector<4x8xf32> -> vector<4x8xf32>
    %cst_32 = arith.constant 0.000000e+00 : f32
    %171 = vector.broadcast %cst_32 : f32 to vector<8x32xf32>
    %172 = vector.extract_strided_slice %169 {offsets = [0, 0], sizes = [8, 1], strides = [1, 1]} : vector<8x4xf32> to vector<8x1xf32>
    %173 = vector.extract_strided_slice %170 {offsets = [0, 0], sizes = [1, 8], strides = [1, 1]} : vector<4x8xf32> to vector<1x8xf32>
    %174 = vector.broadcast %172 : vector<8x1xf32> to vector<8x8xf32>
    %175 = vector.broadcast %173 : vector<1x8xf32> to vector<8x8xf32>
    %176 = arith.addf %174, %175 : vector<8x8xf32>
    %cst_33 = arith.constant 0.000000e+00 : f32
    %177 = vector.broadcast %cst_33 : f32 to vector<8x8xf32>
    %178 = arith.cmpf oge, %176, %177 : vector<8x8xf32>
    %cst_34 = arith.constant 0.00999999977 : f32
    %179 = vector.broadcast %cst_34 : f32 to vector<8x8xf32>
    %180 = arith.mulf %179, %176 : vector<8x8xf32>
    %181 = arith.select %178, %176, %180 : vector<8x8xi1>, vector<8x8xf32>
    %182 = arith.addf %181, %8 : vector<8x8xf32>
    %cst_35 = arith.constant dense<0xFF800000> : vector<8xf32>
    %183 = vector.multi_reduction <maximumf>, %182, %cst_35 [1] : vector<8x8xf32> to vector<8xf32>
    %184 = vector.shape_cast %183 : vector<8xf32> to vector<8x1xf32>
    %185 = vector.broadcast %184 : vector<8x1xf32> to vector<8x8xf32>
    %186 = arith.subf %182, %185 : vector<8x8xf32>
    %187 = math.exp %186 : vector<8x8xf32>
    %cst_36 = arith.constant dense<0.000000e+00> : vector<8xf32>
    %188 = vector.multi_reduction <add>, %187, %cst_36 [1] : vector<8x8xf32> to vector<8xf32>
    %189 = vector.shape_cast %188 : vector<8xf32> to vector<8x1xf32>
    %190 = tpu.reciprocal %189 {approx = true} : vector<8x1xf32> -> vector<8x1xf32>
    %191 = vector.broadcast %190 : vector<8x1xf32> to vector<8x8xf32>
    %192 = arith.mulf %187, %191 : vector<8x8xf32>
    %193 = vector.extract_strided_slice %166 {offsets = [0, 0], sizes = [8, 32], strides = [1, 1]} : vector<8x128xf32> to vector<8x32xf32>
    %cst_37 = arith.constant dense<0.000000e+00> : vector<8x32xf32>
    %194 = tpu.matmul %192, %193, %cst_37 {dimension_numbers = #tpu.dot_dimension_numbers<[1], [0], [0], [1], [0, 0, 1, 1], [], []>} : vector<8x8xf32>, vector<8x32xf32>, vector<8x32xf32> -> vector<8x32xf32>
    %195 = arith.addf %171, %194 : vector<8x32xf32>
    %196 = vector.extract_strided_slice %169 {offsets = [0, 1], sizes = [8, 1], strides = [1, 1]} : vector<8x4xf32> to vector<8x1xf32>
    %197 = vector.extract_strided_slice %170 {offsets = [1, 0], sizes = [1, 8], strides = [1, 1]} : vector<4x8xf32> to vector<1x8xf32>
    %198 = vector.broadcast %196 : vector<8x1xf32> to vector<8x8xf32>
    %199 = vector.broadcast %197 : vector<1x8xf32> to vector<8x8xf32>
    %200 = arith.addf %198, %199 : vector<8x8xf32>
    %cst_38 = arith.constant 0.000000e+00 : f32
    %201 = vector.broadcast %cst_38 : f32 to vector<8x8xf32>
    %202 = arith.cmpf oge, %200, %201 : vector<8x8xf32>
    %cst_39 = arith.constant 0.00999999977 : f32
    %203 = vector.broadcast %cst_39 : f32 to vector<8x8xf32>
    %204 = arith.mulf %203, %200 : vector<8x8xf32>
    %205 = arith.select %202, %200, %204 : vector<8x8xi1>, vector<8x8xf32>
    %206 = arith.addf %205, %8 : vector<8x8xf32>
    %cst_40 = arith.constant dense<0xFF800000> : vector<8xf32>
    %207 = vector.multi_reduction <maximumf>, %206, %cst_40 [1] : vector<8x8xf32> to vector<8xf32>
    %208 = vector.shape_cast %207 : vector<8xf32> to vector<8x1xf32>
    %209 = vector.broadcast %208 : vector<8x1xf32> to vector<8x8xf32>
    %210 = arith.subf %206, %209 : vector<8x8xf32>
    %211 = math.exp %210 : vector<8x8xf32>
    %cst_41 = arith.constant dense<0.000000e+00> : vector<8xf32>
    %212 = vector.multi_reduction <add>, %211, %cst_41 [1] : vector<8x8xf32> to vector<8xf32>
    %213 = vector.shape_cast %212 : vector<8xf32> to vector<8x1xf32>
    %214 = tpu.reciprocal %213 {approx = true} : vector<8x1xf32> -> vector<8x1xf32>
    %215 = vector.broadcast %214 : vector<8x1xf32> to vector<8x8xf32>
    %216 = arith.mulf %211, %215 : vector<8x8xf32>
    %217 = vector.extract_strided_slice %166 {offsets = [0, 32], sizes = [8, 32], strides = [1, 1]} : vector<8x128xf32> to vector<8x32xf32>
    %cst_42 = arith.constant dense<0.000000e+00> : vector<8x32xf32>
    %218 = tpu.matmul %216, %217, %cst_42 {dimension_numbers = #tpu.dot_dimension_numbers<[1], [0], [0], [1], [0, 0, 1, 1], [], []>} : vector<8x8xf32>, vector<8x32xf32>, vector<8x32xf32> -> vector<8x32xf32>
    %219 = arith.addf %195, %218 : vector<8x32xf32>
    %220 = vector.extract_strided_slice %169 {offsets = [0, 2], sizes = [8, 1], strides = [1, 1]} : vector<8x4xf32> to vector<8x1xf32>
    %221 = vector.extract_strided_slice %170 {offsets = [2, 0], sizes = [1, 8], strides = [1, 1]} : vector<4x8xf32> to vector<1x8xf32>
    %222 = vector.broadcast %220 : vector<8x1xf32> to vector<8x8xf32>
    %223 = vector.broadcast %221 : vector<1x8xf32> to vector<8x8xf32>
    %224 = arith.addf %222, %223 : vector<8x8xf32>
    %cst_43 = arith.constant 0.000000e+00 : f32
    %225 = vector.broadcast %cst_43 : f32 to vector<8x8xf32>
    %226 = arith.cmpf oge, %224, %225 : vector<8x8xf32>
    %cst_44 = arith.constant 0.00999999977 : f32
    %227 = vector.broadcast %cst_44 : f32 to vector<8x8xf32>
    %228 = arith.mulf %227, %224 : vector<8x8xf32>
    %229 = arith.select %226, %224, %228 : vector<8x8xi1>, vector<8x8xf32>
    %230 = arith.addf %229, %8 : vector<8x8xf32>
    %cst_45 = arith.constant dense<0xFF800000> : vector<8xf32>
    %231 = vector.multi_reduction <maximumf>, %230, %cst_45 [1] : vector<8x8xf32> to vector<8xf32>
    %232 = vector.shape_cast %231 : vector<8xf32> to vector<8x1xf32>
    %233 = vector.broadcast %232 : vector<8x1xf32> to vector<8x8xf32>
    %234 = arith.subf %230, %233 : vector<8x8xf32>
    %235 = math.exp %234 : vector<8x8xf32>
    %cst_46 = arith.constant dense<0.000000e+00> : vector<8xf32>
    %236 = vector.multi_reduction <add>, %235, %cst_46 [1] : vector<8x8xf32> to vector<8xf32>
    %237 = vector.shape_cast %236 : vector<8xf32> to vector<8x1xf32>
    %238 = tpu.reciprocal %237 {approx = true} : vector<8x1xf32> -> vector<8x1xf32>
    %239 = vector.broadcast %238 : vector<8x1xf32> to vector<8x8xf32>
    %240 = arith.mulf %235, %239 : vector<8x8xf32>
    %241 = vector.extract_strided_slice %166 {offsets = [0, 64], sizes = [8, 32], strides = [1, 1]} : vector<8x128xf32> to vector<8x32xf32>
    %cst_47 = arith.constant dense<0.000000e+00> : vector<8x32xf32>
    %242 = tpu.matmul %240, %241, %cst_47 {dimension_numbers = #tpu.dot_dimension_numbers<[1], [0], [0], [1], [0, 0, 1, 1], [], []>} : vector<8x8xf32>, vector<8x32xf32>, vector<8x32xf32> -> vector<8x32xf32>
    %243 = arith.addf %219, %242 : vector<8x32xf32>
    %244 = vector.extract_strided_slice %169 {offsets = [0, 3], sizes = [8, 1], strides = [1, 1]} : vector<8x4xf32> to vector<8x1xf32>
    %245 = vector.extract_strided_slice %170 {offsets = [3, 0], sizes = [1, 8], strides = [1, 1]} : vector<4x8xf32> to vector<1x8xf32>
    %246 = vector.broadcast %244 : vector<8x1xf32> to vector<8x8xf32>
    %247 = vector.broadcast %245 : vector<1x8xf32> to vector<8x8xf32>
    %248 = arith.addf %246, %247 : vector<8x8xf32>
    %cst_48 = arith.constant 0.000000e+00 : f32
    %249 = vector.broadcast %cst_48 : f32 to vector<8x8xf32>
    %250 = arith.cmpf oge, %248, %249 : vector<8x8xf32>
    %cst_49 = arith.constant 0.00999999977 : f32
    %251 = vector.broadcast %cst_49 : f32 to vector<8x8xf32>
    %252 = arith.mulf %251, %248 : vector<8x8xf32>
    %253 = arith.select %250, %248, %252 : vector<8x8xi1>, vector<8x8xf32>
    %254 = arith.addf %253, %8 : vector<8x8xf32>
    %cst_50 = arith.constant dense<0xFF800000> : vector<8xf32>
    %255 = vector.multi_reduction <maximumf>, %254, %cst_50 [1] : vector<8x8xf32> to vector<8xf32>
    %256 = vector.shape_cast %255 : vector<8xf32> to vector<8x1xf32>
    %257 = vector.broadcast %256 : vector<8x1xf32> to vector<8x8xf32>
    %258 = arith.subf %254, %257 : vector<8x8xf32>
    %259 = math.exp %258 : vector<8x8xf32>
    %cst_51 = arith.constant dense<0.000000e+00> : vector<8xf32>
    %260 = vector.multi_reduction <add>, %259, %cst_51 [1] : vector<8x8xf32> to vector<8xf32>
    %261 = vector.shape_cast %260 : vector<8xf32> to vector<8x1xf32>
    %262 = tpu.reciprocal %261 {approx = true} : vector<8x1xf32> -> vector<8x1xf32>
    %263 = vector.broadcast %262 : vector<8x1xf32> to vector<8x8xf32>
    %264 = arith.mulf %259, %263 : vector<8x8xf32>
    %265 = vector.extract_strided_slice %166 {offsets = [0, 96], sizes = [8, 32], strides = [1, 1]} : vector<8x128xf32> to vector<8x32xf32>
    %cst_52 = arith.constant dense<0.000000e+00> : vector<8x32xf32>
    %266 = tpu.matmul %264, %265, %cst_52 {dimension_numbers = #tpu.dot_dimension_numbers<[1], [0], [0], [1], [0, 0, 1, 1], [], []>} : vector<8x8xf32>, vector<8x32xf32>, vector<8x32xf32> -> vector<8x32xf32>
    %267 = arith.addf %243, %266 : vector<8x32xf32>
    %cst_53 = arith.constant 2.500000e-01 : f32
    %268 = vector.broadcast %cst_53 : f32 to vector<8x32xf32>
    %269 = arith.mulf %267, %268 : vector<8x32xf32>
    %270 = math.tanh %269 : vector<8x32xf32>
    %cst_54 = arith.constant dense<0.000000e+00> : vector<8x128xf32>
    %271 = tpu.matmul %270, %6, %cst_54 {dimension_numbers = #tpu.dot_dimension_numbers<[1], [0], [0], [1], [0, 0, 1, 1], [], []>} : vector<8x32xf32>, vector<32x128xf32>, vector<8x128xf32> -> vector<8x128xf32>
    %272 = vector.extract_strided_slice %7 {offsets = [8, 0], sizes = [4, 128], strides = [1, 1]} : vector<16x128xf32> to vector<4x128xf32>
    %273 = vector.extract_strided_slice %7 {offsets = [12, 0], sizes = [4, 128], strides = [1, 1]} : vector<16x128xf32> to vector<4x128xf32>
    %cst_55 = arith.constant dense<0.000000e+00> : vector<8x4xf32>
    %274 = tpu.matmul %271, %272, %cst_55 {dimension_numbers = #tpu.dot_dimension_numbers<[1], [1], [0], [0], [0, 0, 1, 0], [], []>} : vector<8x128xf32>, vector<4x128xf32>, vector<8x4xf32> -> vector<8x4xf32>
    %cst_56 = arith.constant dense<0.000000e+00> : vector<4x8xf32>
    %275 = tpu.matmul %273, %271, %cst_56 {dimension_numbers = #tpu.dot_dimension_numbers<[1], [1], [0], [0], [0, 0, 1, 0], [], []>} : vector<4x128xf32>, vector<8x128xf32>, vector<4x8xf32> -> vector<4x8xf32>
    %cst_57 = arith.constant 0.000000e+00 : f32
    %276 = vector.broadcast %cst_57 : f32 to vector<8x32xf32>
    %277 = vector.extract_strided_slice %274 {offsets = [0, 0], sizes = [8, 1], strides = [1, 1]} : vector<8x4xf32> to vector<8x1xf32>
    %278 = vector.extract_strided_slice %275 {offsets = [0, 0], sizes = [1, 8], strides = [1, 1]} : vector<4x8xf32> to vector<1x8xf32>
    %279 = vector.broadcast %277 : vector<8x1xf32> to vector<8x8xf32>
    %280 = vector.broadcast %278 : vector<1x8xf32> to vector<8x8xf32>
    %281 = arith.addf %279, %280 : vector<8x8xf32>
    %cst_58 = arith.constant 0.000000e+00 : f32
    %282 = vector.broadcast %cst_58 : f32 to vector<8x8xf32>
    %283 = arith.cmpf oge, %281, %282 : vector<8x8xf32>
    %cst_59 = arith.constant 0.00999999977 : f32
    %284 = vector.broadcast %cst_59 : f32 to vector<8x8xf32>
    %285 = arith.mulf %284, %281 : vector<8x8xf32>
    %286 = arith.select %283, %281, %285 : vector<8x8xi1>, vector<8x8xf32>
    %287 = arith.addf %286, %8 : vector<8x8xf32>
    %cst_60 = arith.constant dense<0xFF800000> : vector<8xf32>
    %288 = vector.multi_reduction <maximumf>, %287, %cst_60 [1] : vector<8x8xf32> to vector<8xf32>
    %289 = vector.shape_cast %288 : vector<8xf32> to vector<8x1xf32>
    %290 = vector.broadcast %289 : vector<8x1xf32> to vector<8x8xf32>
    %291 = arith.subf %287, %290 : vector<8x8xf32>
    %292 = math.exp %291 : vector<8x8xf32>
    %cst_61 = arith.constant dense<0.000000e+00> : vector<8xf32>
    %293 = vector.multi_reduction <add>, %292, %cst_61 [1] : vector<8x8xf32> to vector<8xf32>
    %294 = vector.shape_cast %293 : vector<8xf32> to vector<8x1xf32>
    %295 = tpu.reciprocal %294 {approx = true} : vector<8x1xf32> -> vector<8x1xf32>
    %296 = vector.broadcast %295 : vector<8x1xf32> to vector<8x8xf32>
    %297 = arith.mulf %292, %296 : vector<8x8xf32>
    %298 = vector.extract_strided_slice %271 {offsets = [0, 0], sizes = [8, 32], strides = [1, 1]} : vector<8x128xf32> to vector<8x32xf32>
    %cst_62 = arith.constant dense<0.000000e+00> : vector<8x32xf32>
    %299 = tpu.matmul %297, %298, %cst_62 {dimension_numbers = #tpu.dot_dimension_numbers<[1], [0], [0], [1], [0, 0, 1, 1], [], []>} : vector<8x8xf32>, vector<8x32xf32>, vector<8x32xf32> -> vector<8x32xf32>
    %300 = arith.addf %276, %299 : vector<8x32xf32>
    %301 = vector.extract_strided_slice %274 {offsets = [0, 1], sizes = [8, 1], strides = [1, 1]} : vector<8x4xf32> to vector<8x1xf32>
    %302 = vector.extract_strided_slice %275 {offsets = [1, 0], sizes = [1, 8], strides = [1, 1]} : vector<4x8xf32> to vector<1x8xf32>
    %303 = vector.broadcast %301 : vector<8x1xf32> to vector<8x8xf32>
    %304 = vector.broadcast %302 : vector<1x8xf32> to vector<8x8xf32>
    %305 = arith.addf %303, %304 : vector<8x8xf32>
    %cst_63 = arith.constant 0.000000e+00 : f32
    %306 = vector.broadcast %cst_63 : f32 to vector<8x8xf32>
    %307 = arith.cmpf oge, %305, %306 : vector<8x8xf32>
    %cst_64 = arith.constant 0.00999999977 : f32
    %308 = vector.broadcast %cst_64 : f32 to vector<8x8xf32>
    %309 = arith.mulf %308, %305 : vector<8x8xf32>
    %310 = arith.select %307, %305, %309 : vector<8x8xi1>, vector<8x8xf32>
    %311 = arith.addf %310, %8 : vector<8x8xf32>
    %cst_65 = arith.constant dense<0xFF800000> : vector<8xf32>
    %312 = vector.multi_reduction <maximumf>, %311, %cst_65 [1] : vector<8x8xf32> to vector<8xf32>
    %313 = vector.shape_cast %312 : vector<8xf32> to vector<8x1xf32>
    %314 = vector.broadcast %313 : vector<8x1xf32> to vector<8x8xf32>
    %315 = arith.subf %311, %314 : vector<8x8xf32>
    %316 = math.exp %315 : vector<8x8xf32>
    %cst_66 = arith.constant dense<0.000000e+00> : vector<8xf32>
    %317 = vector.multi_reduction <add>, %316, %cst_66 [1] : vector<8x8xf32> to vector<8xf32>
    %318 = vector.shape_cast %317 : vector<8xf32> to vector<8x1xf32>
    %319 = tpu.reciprocal %318 {approx = true} : vector<8x1xf32> -> vector<8x1xf32>
    %320 = vector.broadcast %319 : vector<8x1xf32> to vector<8x8xf32>
    %321 = arith.mulf %316, %320 : vector<8x8xf32>
    %322 = vector.extract_strided_slice %271 {offsets = [0, 32], sizes = [8, 32], strides = [1, 1]} : vector<8x128xf32> to vector<8x32xf32>
    %cst_67 = arith.constant dense<0.000000e+00> : vector<8x32xf32>
    %323 = tpu.matmul %321, %322, %cst_67 {dimension_numbers = #tpu.dot_dimension_numbers<[1], [0], [0], [1], [0, 0, 1, 1], [], []>} : vector<8x8xf32>, vector<8x32xf32>, vector<8x32xf32> -> vector<8x32xf32>
    %324 = arith.addf %300, %323 : vector<8x32xf32>
    %325 = vector.extract_strided_slice %274 {offsets = [0, 2], sizes = [8, 1], strides = [1, 1]} : vector<8x4xf32> to vector<8x1xf32>
    %326 = vector.extract_strided_slice %275 {offsets = [2, 0], sizes = [1, 8], strides = [1, 1]} : vector<4x8xf32> to vector<1x8xf32>
    %327 = vector.broadcast %325 : vector<8x1xf32> to vector<8x8xf32>
    %328 = vector.broadcast %326 : vector<1x8xf32> to vector<8x8xf32>
    %329 = arith.addf %327, %328 : vector<8x8xf32>
    %cst_68 = arith.constant 0.000000e+00 : f32
    %330 = vector.broadcast %cst_68 : f32 to vector<8x8xf32>
    %331 = arith.cmpf oge, %329, %330 : vector<8x8xf32>
    %cst_69 = arith.constant 0.00999999977 : f32
    %332 = vector.broadcast %cst_69 : f32 to vector<8x8xf32>
    %333 = arith.mulf %332, %329 : vector<8x8xf32>
    %334 = arith.select %331, %329, %333 : vector<8x8xi1>, vector<8x8xf32>
    %335 = arith.addf %334, %8 : vector<8x8xf32>
    %cst_70 = arith.constant dense<0xFF800000> : vector<8xf32>
    %336 = vector.multi_reduction <maximumf>, %335, %cst_70 [1] : vector<8x8xf32> to vector<8xf32>
    %337 = vector.shape_cast %336 : vector<8xf32> to vector<8x1xf32>
    %338 = vector.broadcast %337 : vector<8x1xf32> to vector<8x8xf32>
    %339 = arith.subf %335, %338 : vector<8x8xf32>
    %340 = math.exp %339 : vector<8x8xf32>
    %cst_71 = arith.constant dense<0.000000e+00> : vector<8xf32>
    %341 = vector.multi_reduction <add>, %340, %cst_71 [1] : vector<8x8xf32> to vector<8xf32>
    %342 = vector.shape_cast %341 : vector<8xf32> to vector<8x1xf32>
    %343 = tpu.reciprocal %342 {approx = true} : vector<8x1xf32> -> vector<8x1xf32>
    %344 = vector.broadcast %343 : vector<8x1xf32> to vector<8x8xf32>
    %345 = arith.mulf %340, %344 : vector<8x8xf32>
    %346 = vector.extract_strided_slice %271 {offsets = [0, 64], sizes = [8, 32], strides = [1, 1]} : vector<8x128xf32> to vector<8x32xf32>
    %cst_72 = arith.constant dense<0.000000e+00> : vector<8x32xf32>
    %347 = tpu.matmul %345, %346, %cst_72 {dimension_numbers = #tpu.dot_dimension_numbers<[1], [0], [0], [1], [0, 0, 1, 1], [], []>} : vector<8x8xf32>, vector<8x32xf32>, vector<8x32xf32> -> vector<8x32xf32>
    %348 = arith.addf %324, %347 : vector<8x32xf32>
    %349 = vector.extract_strided_slice %274 {offsets = [0, 3], sizes = [8, 1], strides = [1, 1]} : vector<8x4xf32> to vector<8x1xf32>
    %350 = vector.extract_strided_slice %275 {offsets = [3, 0], sizes = [1, 8], strides = [1, 1]} : vector<4x8xf32> to vector<1x8xf32>
    %351 = vector.broadcast %349 : vector<8x1xf32> to vector<8x8xf32>
    %352 = vector.broadcast %350 : vector<1x8xf32> to vector<8x8xf32>
    %353 = arith.addf %351, %352 : vector<8x8xf32>
    %cst_73 = arith.constant 0.000000e+00 : f32
    %354 = vector.broadcast %cst_73 : f32 to vector<8x8xf32>
    %355 = arith.cmpf oge, %353, %354 : vector<8x8xf32>
    %cst_74 = arith.constant 0.00999999977 : f32
    %356 = vector.broadcast %cst_74 : f32 to vector<8x8xf32>
    %357 = arith.mulf %356, %353 : vector<8x8xf32>
    %358 = arith.select %355, %353, %357 : vector<8x8xi1>, vector<8x8xf32>
    %359 = arith.addf %358, %8 : vector<8x8xf32>
    %cst_75 = arith.constant dense<0xFF800000> : vector<8xf32>
    %360 = vector.multi_reduction <maximumf>, %359, %cst_75 [1] : vector<8x8xf32> to vector<8xf32>
    %361 = vector.shape_cast %360 : vector<8xf32> to vector<8x1xf32>
    %362 = vector.broadcast %361 : vector<8x1xf32> to vector<8x8xf32>
    %363 = arith.subf %359, %362 : vector<8x8xf32>
    %364 = math.exp %363 : vector<8x8xf32>
    %cst_76 = arith.constant dense<0.000000e+00> : vector<8xf32>
    %365 = vector.multi_reduction <add>, %364, %cst_76 [1] : vector<8x8xf32> to vector<8xf32>
    %366 = vector.shape_cast %365 : vector<8xf32> to vector<8x1xf32>
    %367 = tpu.reciprocal %366 {approx = true} : vector<8x1xf32> -> vector<8x1xf32>
    %368 = vector.broadcast %367 : vector<8x1xf32> to vector<8x8xf32>
    %369 = arith.mulf %364, %368 : vector<8x8xf32>
    %370 = vector.extract_strided_slice %271 {offsets = [0, 96], sizes = [8, 32], strides = [1, 1]} : vector<8x128xf32> to vector<8x32xf32>
    %cst_77 = arith.constant dense<0.000000e+00> : vector<8x32xf32>
    %371 = tpu.matmul %369, %370, %cst_77 {dimension_numbers = #tpu.dot_dimension_numbers<[1], [0], [0], [1], [0, 0, 1, 1], [], []>} : vector<8x8xf32>, vector<8x32xf32>, vector<8x32xf32> -> vector<8x32xf32>
    %372 = arith.addf %348, %371 : vector<8x32xf32>
    %cst_78 = arith.constant 2.500000e-01 : f32
    %373 = vector.broadcast %cst_78 : f32 to vector<8x32xf32>
    %374 = arith.mulf %372, %373 : vector<8x32xf32>
    %375 = math.tanh %374 : vector<8x32xf32>
    %cst_79 = arith.constant dense<0.000000e+00> : vector<8x8xf32>
    %376 = tpu.matmul %165, %375, %cst_79 {dimension_numbers = #tpu.dot_dimension_numbers<[1], [1], [0], [0], [0, 0, 1, 0], [], []>} : vector<8x32xf32>, vector<8x32xf32>, vector<8x8xf32> -> vector<8x8xf32>
    %c0_80 = arith.constant 0 : index
    %c0_81 = arith.constant 0 : index
    %377 = vector.load %arg2[%c0_80, %c0_81] : memref<8x8xf32, #tpu.memory_space<vmem>>, vector<8x8xf32>
    tpu.vector_store %arg2[%c0_80, %c0_81], %376 {strides = array<i32>} : memref<8x8xf32, #tpu.memory_space<vmem>>, vector<8x8xf32>,
    return
  }
}

</mosaic_0001>

<llo_original>
// kernel: tpu_custom_call.1
$region0: #{tpu_custom_call.1}
  #allocation0 [shape = 'u32[]', space=smem, size = 0x4, offset = 0x4, fixed_abs, tag = 'smem constant byte address 0x4 - core index']
  #allocation1 [shape = 'u32[72,128]{1,0:T(1,128)}', space=vmem, size = 0x9000, scoped, tag = 'internal scratch']
  %s0 = inlined_call_operand.vmem [shape: f32[72,32], index: 0, kind: input, shape index: {}]
  %s1 = inlined_call_operand.hbm [shape: f32[144,128], index: 1, kind: input, shape index: {}]
  %s2 = inlined_call_operand.hbm [shape: f32[8,8], index: 2, kind: output, shape index: {}]
  %s3 = sld [smem:[#allocation0]]
  $region22: #{tpu_custom_call.1} parent=0
    _
  %s5 = ssub.s32 1, %s3
  %s6 = scalar_select 0, %s5, %s3
  $region1: #{tpu_custom_call.1} parent=0
    #allocation2 [shape = 'u8[73728]{0}', space=vmem, size = 0x12000, scoped, tag = 'input window, operand 1, single buffered']
    #allocation3 [shape = 's32[1]{0}', space=sflag, size = 0x4, scoped, tag = 'scoped memory for tpu_custom_call.1']
    #allocation4 [shape = 's32[1]{0}', space=sflag, size = 0x4, scoped, tag = 'scoped memory for tpu_custom_call.1']
    #allocation5 [shape = 'u8[4096]{0}', space=vmem, size = 0x1000, scoped, tag = 'output window, operand 0, single buffered']
    %7 = vsyncpa [#allocation3], 0
    %8 = vsyncpa [#allocation4], 0
    // Predicated region
    $region2: #{tpu_custom_call.1} parent=1 // pred_check
      _
    $region3: #{tpu_custom_call.1} parent=1 // pred_check_branch
      %10 = sbr.rel (0) target = $region5
    $region4: #{tpu_custom_call.1} parent=1 // pred_region
      _
    $region5: #{tpu_custom_call.1} parent=1 // pred_fallthru
      _
    // Predicated region
    $region6: #{tpu_custom_call.1} parent=1 // pred_check
      _
    $region7: #{tpu_custom_call.1} parent=1 // pred_check_branch
      %12 = sbr.rel (0) target = $region9
    $region8: #{tpu_custom_call.1} parent=1 // pred_region
      %14 = vsyncadd [#allocation3], 0
      %s15 = sshll.u32 %s1, 4
      %s16 = int_to_ptr.hbm [resolvable:$true] %s15
      %s17 = sshll.u32 [#allocation2], 4
      %s18 = int_to_ptr.vmem [resolvable:$true] %s17
      %23 = dma.hbm_to_vmem [thread:$0]  %s16, 2304, %s18, [#allocation3], 128, 128, 8
    $region9: #{tpu_custom_call.1} parent=1 // pred_fallthru
      _
    // Predicated region
    $region10: #{tpu_custom_call.1} parent=1 // pred_check
      _
    $region11: #{tpu_custom_call.1} parent=1 // pred_check_branch
      %25 = sbr.rel (0) target = $region13
    $region12: #{tpu_custom_call.1} parent=1 // pred_region
      %27 = dma.done [#allocation3], 2304
    $region13: #{tpu_custom_call.1} parent=1 // pred_fallthru
      _
    %v28 = vld [vmem:[%s0] sm:$0xff]
    %v29 = vld [vmem:[%s0 + $0x8] sm:$0xff]
    %v30 = vld [vmem:[%s0 + $0x10] sm:$0xff]
    %v31 = vld [vmem:[%s0 + $0x18] sm:$0xff]
    %v32 = vld [vmem:[%s0 + $0x20] sm:$0xff]
    %v33 = vld [vmem:[%s0 + $0x28] sm:$0xff]
    %v34 = vld [vmem:[%s0 + $0x30] sm:$0xff]
    %v35 = vld [vmem:[%s0 + $0x38] sm:$0xff]
    %v36 = vld [vmem:[%s0 + $0x40] sm:$0xff]
    %v37 = vld [vmem:[#allocation2] sm:$0xff]
    %v38 = vld [vmem:[#allocation2 + $0x8] sm:$0xff]
    %v39 = vld [vmem:[#allocation2 + $0x10] sm:$0xff]
    %v40 = vld [vmem:[#allocation2 + $0x18] sm:$0xff]
    %v41 = vld [vmem:[#allocation2 + $0x20] sm:$0xff]
    %v42 = vld [vmem:[#allocation2 + $0x28] sm:$0xff]
    %v43 = vld [vmem:[#allocation2 + $0x30] sm:$0xff]
    %v44 = vld [vmem:[#allocation2 + $0x38] sm:$0xff]
    %v45 = vld [vmem:[#allocation2 + $0x40] sm:$0x1]
    %v46 = vld [vmem:[#allocation2 + $0x48] sm:$0xff]
    %v47 = vld [vmem:[#allocation2 + $0x50] sm:$0xff]
    %v48 = vld [vmem:[#allocation2 + $0x58] sm:$0xff]
    %v49 = vld [vmem:[#allocation2 + $0x60] sm:$0xff]
    %v50 = vld [vmem:[#allocation2 + $0x68] sm:$0xff]
    %v51 = vld [vmem:[#allocation2 + $0x70] sm:$0xff]
    %v52 = vld [vmem:[#allocation2 + $0x78] sm:$0xff]
    %v53 = vld [vmem:[#allocation2 + $0x80] sm:$0xff]
    %v54 = vld [vmem:[#allocation2 + $0x88] sm:$0xff]
    %v55 = vperm.slane %v45, 0
    %vm56 = vcmask 261120
    %v58 = vsel %vm56, %v28, 0
    %v61 = vsel %vm56, %v29, 0
    %v64 = vsel %vm56, %v30, 0
    %v67 = vsel %vm56, %v31, 0
    %v70 = vsel %vm56, %v32, 0
    %v73 = vsel %vm56, %v33, 0
    %v76 = vsel %vm56, %v34, 0
    %v79 = vsel %vm56, %v35, 0
    %81 = vmatpush.msra.mxu0 0.0
    %82 = vmatpush.msra.mxu0 0.0
    %83 = vmatpush.msra.mxu0 0.0
    %84 = vmatpush.msra.mxu0 0.0
    %85 = vmatpush.msra.mxu0 0.0
    %86 = vmatpush.msra.mxu0 0.0
    %87 = vmatpush.msra.mxu0 0.0
    %88 = vmatpush.msra.mxu0 0.0
    %89 = vmatpush.msra.mxu0 0.0
    %90 = vmatpush.msra.mxu0 0.0
    %91 = vmatpush.msra.mxu0 0.0
    %92 = vmatpush.msra.mxu0 0.0
    %93 = vmatpush.msra.mxu0 %v40
    %94 = vmatpush.msra.mxu0 %v39
    %95 = vmatpush.msra.mxu0 %v38
    %96 = vmatpush.msra.mxu0 %v37
    %97 = vmatmul.f32.gmra.mxu0 %v58
    %v98 = vpop.f32.mrf.mxu0
    %v99 = vadd.f32 %v55, %v98
    %100 = vmatmul.f32.gmra.mxu0 %v61
    %v101 = vpop.f32.mrf.mxu0
    %v102 = vadd.f32 %v55, %v101
    %103 = vmatmul.f32.gmra.mxu0 %v64
    %v104 = vpop.f32.mrf.mxu0
    %v105 = vadd.f32 %v55, %v104
    %106 = vmatmul.f32.gmra.mxu0 %v67
    %v107 = vpop.f32.mrf.mxu0
    %v108 = vadd.f32 %v55, %v107
    %109 = vmatmul.f32.gmra.mxu0 %v70
    %v110 = vpop.f32.mrf.mxu0
    %v111 = vadd.f32 %v55, %v110
    %112 = vmatmul.f32.gmra.mxu0 %v73
    %v113 = vpop.f32.mrf.mxu0
    %v114 = vadd.f32 %v55, %v113
    %115 = vmatmul.f32.gmra.mxu0 %v76
    %v116 = vpop.f32.mrf.mxu0
    %v117 = vadd.f32 %v55, %v116
    %118 = vmatmul.f32.gmra.mxu0 %v79
    %v119 = vpop.f32.mrf.mxu0
    %v120 = vadd.f32 %v55, %v119
    %121 = vdwg.mxu0
    %v123 = vsel %vm56, 0.0, 0
    %125 = vmatpush.msra.mxu0 0.0
    %126 = vmatpush.msra.mxu0 0.0
    %127 = vmatpush.msra.mxu0 0.0
    %128 = vmatpush.msra.mxu0 0.0
    %129 = vmatpush.msra.mxu0 0.0
    %130 = vmatpush.msra.mxu0 0.0
    %131 = vmatpush.msra.mxu0 0.0
    %132 = vmatpush.msra.mxu0 0.0
    %133 = vmatpush.msra.mxu0 0.0
    %134 = vmatpush.msra.mxu0 0.0
    %135 = vmatpush.msra.mxu0 0.0
    %136 = vmatpush.msra.mxu0 0.0
    %137 = vmatpush.msra.mxu0 %v44
    %138 = vmatpush.msra.mxu0 %v43
    %139 = vmatpush.msra.mxu0 %v42
    %140 = vmatpush.msra.mxu0 %v41
    %141 = vmatmul.f32.gmra.mxu0 %v123
    %v142 = vpop.f32.mrf.mxu0
    %v143 = vadd.f32 0.0, %v142
    %144 = vdwg.mxu0
    %v145 = vadd.f32 %v99, %v143
    %v146 = vxor.u32 %v145, 2147483648
    %v147 = vmul.f32 %v146, 1.442695
    %v148 = vpow.pop %v147
    %v149 = vadd.f32 %v148, 1.0
    %v150 = vrcp.pop %v149
    %v151 = vmul.f32 %v149, %v150
    %v152 = vsub.f32 1.0, %v151
    %v153 = vmul.f32 %v150, %v152
    %v154 = vadd.f32 %v150, %v153
    %vm155 = vweird.f32 %v149
    %vm156 = vweird.f32 %v150
    %vm157 = vmor %vm155, %vm156
    %v158 = vsel %vm157, %v150, %v154
    %v159 = vand.u32 2147483647, %v149
    %vm160 = vcmp.eq.f32.partialorder %v159, 8.507059e+37
    %v161 = vand.u32 %v149, 2147483648
    %v162 = vor.u32 1.1754944e-38, %v161
    %v163 = vsel %vm160, %v162, %v158
    %v164 = vmul.f32 1.0, %v163
    %v165 = vtanh.pop %v145
    %v166 = vmul.f32 %v164, 0.0
    %168 = vrot.lane.b32.xlu0 %v165, 64
    %v169 = vpop.permute.xlu0 %168
    %v171 = vmul.f32 %v164, %v169
    %173 = vrot.lane.b32.xlu0 %v171, 96
    %v174 = vpop.permute.xlu0 %173
    %v176 = vadd.f32 %v166, %v174
    %v177 = vtanh.pop %v176
    %179 = vrot.lane.b32.xlu0 %v177, 64
    %v180 = vpop.permute.xlu0 %179
    %v182 = vmul.f32 %v164, %v180
    %184 = vrot.lane.b32.xlu0 %v182, 64
    %v185 = vpop.permute.xlu0 %184
    %v186 = vsel %vm56, %v185, 0
    %188 = vmatpush.msra.mxu0 0.0
    %189 = vmatpush.msra.mxu0 0.0
    %190 = vmatpush.msra.mxu0 0.0
    %191 = vmatpush.msra.mxu0 0.0
    %192 = vmatpush.msra.mxu0 0.0
    %193 = vmatpush.msra.mxu0 0.0
    %194 = vmatpush.msra.mxu0 0.0
    %195 = vmatpush.msra.mxu0 0.0
    %196 = vmatpush.msra.mxu0 0.0
    %197 = vmatpush.msra.mxu0 0.0
    %198 = vmatpush.msra.mxu0 0.0
    %199 = vmatpush.msra.mxu0 0.0
    %200 = vmatpush.msra.mxu0 %v44
    %201 = vmatpush.msra.mxu0 %v43
    %202 = vmatpush.msra.mxu0 %v42
    %203 = vmatpush.msra.mxu0 %v41
    %204 = vmatmul.f32.gmra.mxu0 %v186
    %v205 = vpop.f32.mrf.mxu0
    %v206 = vadd.f32 0.0, %v205
    %207 = vdwg.mxu0
    %v208 = vadd.f32 %v102, %v206
    %v209 = vxor.u32 %v208, 2147483648
    %v210 = vmul.f32 %v209, 1.442695
    %v211 = vpow.pop %v210
    %v212 = vadd.f32 %v211, 1.0
    %v213 = vrcp.pop %v212
    %v214 = vmul.f32 %v212, %v213
    %v215 = vsub.f32 1.0, %v214
    %v216 = vmul.f32 %v213, %v215
    %v217 = vadd.f32 %v213, %v216
    %vm218 = vweird.f32 %v212
    %vm219 = vweird.f32 %v213
    %vm220 = vmor %vm218, %vm219
    %v221 = vsel %vm220, %v213, %v217
    %v222 = vand.u32 2147483647, %v212
    %vm223 = vcmp.eq.f32.partialorder %v222, 8.507059e+37
    %v224 = vand.u32 %v212, 2147483648
    %v225 = vor.u32 1.1754944e-38, %v224
    %v226 = vsel %vm223, %v225, %v221
    %v227 = vmul.f32 1.0, %v226
    %v228 = vtanh.pop %v208
    %v229 = vmul.f32 %v227, %v176
    %231 = vrot.lane.b32.xlu0 %v228, 64
    %v232 = vpop.permute.xlu0 %231
    %v234 = vmul.f32 %v227, %v232
    %236 = vrot.lane.b32.xlu0 %v234, 96
    %v237 = vpop.permute.xlu0 %236
    %v239 = vadd.f32 %v229, %v237
    %v240 = vtanh.pop %v239
    %242 = vrot.lane.b32.xlu0 %v240, 64
    %v243 = vpop.permute.xlu0 %242
    %v245 = vmul.f32 %v227, %v243
    %247 = vrot.lane.b32.xlu0 %v245, 64
    %v248 = vpop.permute.xlu0 %247
    %v249 = vsel %vm56, %v248, 0
    %251 = vmatpush.msra.mxu0 0.0
    %252 = vmatpush.msra.mxu0 0.0
    %253 = vmatpush.msra.mxu0 0.0
    %254 = vmatpush.msra.mxu0 0.0
    %255 = vmatpush.msra.mxu0 0.0
    %256 = vmatpush.msra.mxu0 0.0
    %257 = vmatpush.msra.mxu0 0.0
    %258 = vmatpush.msra.mxu0 0.0
    %259 = vmatpush.msra.mxu0 0.0
    %260 = vmatpush.msra.mxu0 0.0
    %261 = vmatpush.msra.mxu0 0.0
    %262 = vmatpush.msra.mxu0 0.0
    %263 = vmatpush.msra.mxu0 %v44
    %264 = vmatpush.msra.mxu0 %v43
    %265 = vmatpush.msra.mxu0 %v42
    %266 = vmatpush.msra.mxu0 %v41
    %267 = vmatmul.f32.gmra.mxu0 %v249
    %v268 = vpop.f32.mrf.mxu0
    %v269 = vadd.f32 0.0, %v268
    %270 = vdwg.mxu0
    %v271 = vadd.f32 %v105, %v269
    %v272 = vxor.u32 %v271, 2147483648
    %v273 = vmul.f32 %v272, 1.442695
    %v274 = vpow.pop %v273
    %v275 = vadd.f32 %v274, 1.0
    %v276 = vrcp.pop %v275
    %v277 = vmul.f32 %v275, %v276
    %v278 = vsub.f32 1.0, %v277
    %v279 = vmul.f32 %v276, %v278
    %v280 = vadd.f32 %v276, %v279
    %vm281 = vweird.f32 %v275
    %vm282 = vweird.f32 %v276
    %vm283 = vmor %vm281, %vm282
    %v284 = vsel %vm283, %v276, %v280
    %v285 = vand.u32 2147483647, %v275
    %vm286 = vcmp.eq.f32.partialorder %v285, 8.507059e+37
    %v287 = vand.u32 %v275, 2147483648
    %v288 = vor.u32 1.1754944e-38, %v287
    %v289 = vsel %vm286, %v288, %v284
    %v290 = vmul.f32 1.0, %v289
    %v291 = vtanh.pop %v271
    %v292 = vmul.f32 %v290, %v239
    %294 = vrot.lane.b32.xlu0 %v291, 64
    %v295 = vpop.permute.xlu0 %294
    %v297 = vmul.f32 %v290, %v295
    %299 = vrot.lane.b32.xlu0 %v297, 96
    %v300 = vpop.permute.xlu0 %299
    %v302 = vadd.f32 %v292, %v300
    %v303 = vtanh.pop %v302
    %305 = vrot.lane.b32.xlu0 %v303, 64
    %v306 = vpop.permute.xlu0 %305
    %v308 = vmul.f32 %v290, %v306
    %310 = vrot.lane.b32.xlu0 %v308, 64
    %v311 = vpop.permute.xlu0 %310
    %v312 = vsel %vm56, %v311, 0
    %314 = vmatpush.msra.mxu0 0.0
    %315 = vmatpush.msra.mxu0 0.0
    %316 = vmatpush.msra.mxu0 0.0
    %317 = vmatpush.msra.mxu0 0.0
    %318 = vmatpush.msra.mxu0 0.0
    %319 = vmatpush.msra.mxu0 0.0
    %320 = vmatpush.msra.mxu0 0.0
    %321 = vmatpush.msra.mxu0 0.0
    %322 = vmatpush.msra.mxu0 0.0
    %323 = vmatpush.msra.mxu0 0.0
    %324 = vmatpush.msra.mxu0 0.0
    %325 = vmatpush.msra.mxu0 0.0
    %326 = vmatpush.msra.mxu0 %v44
    %327 = vmatpush.msra.mxu0 %v43
    %328 = vmatpush.msra.mxu0 %v42
    %329 = vmatpush.msra.mxu0 %v41
    %330 = vmatmul.f32.gmra.mxu0 %v312
    %v331 = vpop.f32.mrf.mxu0
    %v332 = vadd.f32 0.0, %v331
    %333 = vdwg.mxu0
    %v334 = vadd.f32 %v108, %v332
    %v335 = vxor.u32 %v334, 2147483648
    %v336 = vmul.f32 %v335, 1.442695
    %v337 = vpow.pop %v336
    %v338 = vadd.f32 %v337, 1.0
    %v339 = vrcp.pop %v338
    %v340 = vmul.f32 %v338, %v339
    %v341 = vsub.f32 1.0, %v340
    %v342 = vmul.f32 %v339, %v341
    %v343 = vadd.f32 %v339, %v342
    %vm344 = vweird.f32 %v338
    %vm345 = vweird.f32 %v339
    %vm346 = vmor %vm344, %vm345
    %v347 = vsel %vm346, %v339, %v343
    %v348 = vand.u32 2147483647, %v338
    %vm349 = vcmp.eq.f32.partialorder %v348, 8.507059e+37
    %v350 = vand.u32 %v338, 2147483648
    %v351 = vor.u32 1.1754944e-38, %v350
    %v352 = vsel %vm349, %v351, %v347
    %v353 = vmul.f32 1.0, %v352
    %v354 = vtanh.pop %v334
    %v355 = vmul.f32 %v353, %v302
    %357 = vrot.lane.b32.xlu0 %v354, 64
    %v358 = vpop.permute.xlu0 %357
    %v360 = vmul.f32 %v353, %v358
    %362 = vrot.lane.b32.xlu0 %v360, 96
    %v363 = vpop.permute.xlu0 %362
    %v365 = vadd.f32 %v355, %v363
    %v366 = vtanh.pop %v365
    %368 = vrot.lane.b32.xlu0 %v366, 64
    %v369 = vpop.permute.xlu0 %368
    %v371 = vmul.f32 %v353, %v369
    %373 = vrot.lane.b32.xlu0 %v371, 64
    %v374 = vpop.permute.xlu0 %373
    %v375 = vsel %vm56, %v374, 0
    %377 = vmatpush.msra.mxu0 0.0
    %378 = vmatpush.msra.mxu0 0.0
    %379 = vmatpush.msra.mxu0 0.0
    %380 = vmatpush.msra.mxu0 0.0
    %381 = vmatpush.msra.mxu0 0.0
    %382 = vmatpush.msra.mxu0 0.0
    %383 = vmatpush.msra.mxu0 0.0
    %384 = vmatpush.msra.mxu0 0.0
    %385 = vmatpush.msra.mxu0 0.0
    %386 = vmatpush.msra.mxu0 0.0
    %387 = vmatpush.msra.mxu0 0.0
    %388 = vmatpush.msra.mxu0 0.0
    %389 = vmatpush.msra.mxu0 %v44
    %390 = vmatpush.msra.mxu0 %v43
    %391 = vmatpush.msra.mxu0 %v42
    %392 = vmatpush.msra.mxu0 %v41
    %393 = vmatmul.f32.gmra.mxu0 %v375
    %v394 = vpop.f32.mrf.mxu0
    %v395 = vadd.f32 0.0, %v394
    %396 = vdwg.mxu0
    %v397 = vadd.f32 %v111, %v395
    %v398 = vxor.u32 %v397, 2147483648
    %v399 = vmul.f32 %v398, 1.442695
    %v400 = vpow.pop %v399
    %v401 = vadd.f32 %v400, 1.0
    %v402 = vrcp.pop %v401
    %v403 = vmul.f32 %v401, %v402
    %v404 = vsub.f32 1.0, %v403
    %v405 = vmul.f32 %v402, %v404
    %v406 = vadd.f32 %v402, %v405
    %vm407 = vweird.f32 %v401
    %vm408 = vweird.f32 %v402
    %vm409 = vmor %vm407, %vm408
    %v410 = vsel %vm409, %v402, %v406
    %v411 = vand.u32 2147483647, %v401
    %vm412 = vcmp.eq.f32.partialorder %v411, 8.507059e+37
    %v413 = vand.u32 %v401, 2147483648
    %v414 = vor.u32 1.1754944e-38, %v413
    %v415 = vsel %vm412, %v414, %v410
    %v416 = vmul.f32 1.0, %v415
    %v417 = vtanh.pop %v397
    %v418 = vmul.f32 %v416, %v365
    %420 = vrot.lane.b32.xlu0 %v417, 64
    %v421 = vpop.permute.xlu0 %420
    %v423 = vmul.f32 %v416, %v421
    %425 = vrot.lane.b32.xlu0 %v423, 96
    %v426 = vpop.permute.xlu0 %425
    %v428 = vadd.f32 %v418, %v426
    %v429 = vtanh.pop %v428
    %431 = vrot.lane.b32.xlu0 %v429, 64
    %v432 = vpop.permute.xlu0 %431
    %v434 = vmul.f32 %v416, %v432
    %436 = vrot.lane.b32.xlu0 %v434, 64
    %v437 = vpop.permute.xlu0 %436
    %v438 = vsel %vm56, %v437, 0
    %440 = vmatpush.msra.mxu0 0.0
    %441 = vmatpush.msra.mxu0 0.0
    %442 = vmatpush.msra.mxu0 0.0
    %443 = vmatpush.msra.mxu0 0.0
    %444 = vmatpush.msra.mxu0 0.0
    %445 = vmatpush.msra.mxu0 0.0
    %446 = vmatpush.msra.mxu0 0.0
    %447 = vmatpush.msra.mxu0 0.0
    %448 = vmatpush.msra.mxu0 0.0
    %449 = vmatpush.msra.mxu0 0.0
    %450 = vmatpush.msra.mxu0 0.0
    %451 = vmatpush.msra.mxu0 0.0
    %452 = vmatpush.msra.mxu0 %v44
    %453 = vmatpush.msra.mxu0 %v43
    %454 = vmatpush.msra.mxu0 %v42
    %455 = vmatpush.msra.mxu0 %v41
    %456 = vmatmul.f32.gmra.mxu0 %v438
    %v457 = vpop.f32.mrf.mxu0
    %v458 = vadd.f32 0.0, %v457
    %459 = vdwg.mxu0
    %v460 = vadd.f32 %v114, %v458
    %v461 = vxor.u32 %v460, 2147483648
    %v462 = vmul.f32 %v461, 1.442695
    %v463 = vpow.pop %v462
    %v464 = vadd.f32 %v463, 1.0
    %v465 = vrcp.pop %v464
    %v466 = vmul.f32 %v464, %v465
    %v467 = vsub.f32 1.0, %v466
    %v468 = vmul.f32 %v465, %v467
    %v469 = vadd.f32 %v465, %v468
    %vm470 = vweird.f32 %v464
    %vm471 = vweird.f32 %v465
    %vm472 = vmor %vm470, %vm471
    %v473 = vsel %vm472, %v465, %v469
    %v474 = vand.u32 2147483647, %v464
    %vm475 = vcmp.eq.f32.partialorder %v474, 8.507059e+37
    %v476 = vand.u32 %v464, 2147483648
    %v477 = vor.u32 1.1754944e-38, %v476
    %v478 = vsel %vm475, %v477, %v473
    %v479 = vmul.f32 1.0, %v478
    %v480 = vtanh.pop %v460
    %v481 = vmul.f32 %v479, %v428
    %483 = vrot.lane.b32.xlu0 %v480, 64
    %v484 = vpop.permute.xlu0 %483
    %v486 = vmul.f32 %v479, %v484
    %488 = vrot.lane.b32.xlu0 %v486, 96
    %v489 = vpop.permute.xlu0 %488
    %v491 = vadd.f32 %v481, %v489
    %v492 = vtanh.pop %v491
    %494 = vrot.lane.b32.xlu0 %v492, 64
    %v495 = vpop.permute.xlu0 %494
    %v497 = vmul.f32 %v479, %v495
    %499 = vrot.lane.b32.xlu0 %v497, 64
    %v500 = vpop.permute.xlu0 %499
    %v501 = vsel %vm56, %v500, 0
    %503 = vmatpush.msra.mxu0 0.0
    %504 = vmatpush.msra.mxu0 0.0
    %505 = vmatpush.msra.mxu0 0.0
    %506 = vmatpush.msra.mxu0 0.0
    %507 = vmatpush.msra.mxu0 0.0
    %508 = vmatpush.msra.mxu0 0.0
    %509 = vmatpush.msra.mxu0 0.0
    %510 = vmatpush.msra.mxu0 0.0
    %511 = vmatpush.msra.mxu0 0.0
    %512 = vmatpush.msra.mxu0 0.0
    %513 = vmatpush.msra.mxu0 0.0
    %514 = vmatpush.msra.mxu0 0.0
    %515 = vmatpush.msra.mxu0 %v44
    %516 = vmatpush.msra.mxu0 %v43
    %517 = vmatpush.msra.mxu0 %v42
    %518 = vmatpush.msra.mxu0 %v41
    %519 = vmatmul.f32.gmra.mxu0 %v501
    %v520 = vpop.f32.mrf.mxu0
    %v521 = vadd.f32 0.0, %v520
    %522 = vdwg.mxu0
    %v523 = vadd.f32 %v117, %v521
    %v524 = vxor.u32 %v523, 2147483648
    %v525 = vmul.f32 %v524, 1.442695
    %v526 = vpow.pop %v525
    %v527 = vadd.f32 %v526, 1.0
    %v528 = vrcp.pop %v527
    %v529 = vmul.f32 %v527, %v528
    %v530 = vsub.f32 1.0, %v529
    %v531 = vmul.f32 %v528, %v530
    %v532 = vadd.f32 %v528, %v531
    %vm533 = vweird.f32 %v527
    %vm534 = vweird.f32 %v528
    %vm535 = vmor %vm533, %vm534
    %v536 = vsel %vm535, %v528, %v532
    %v537 = vand.u32 2147483647, %v527
    %vm538 = vcmp.eq.f32.partialorder %v537, 8.507059e+37
    %v539 = vand.u32 %v527, 2147483648
    %v540 = vor.u32 1.1754944e-38, %v539
    %v541 = vsel %vm538, %v540, %v536
    %v542 = vmul.f32 1.0, %v541
    %v543 = vtanh.pop %v523
    %v544 = vmul.f32 %v542, %v491
    %546 = vrot.lane.b32.xlu0 %v543, 64
    %v547 = vpop.permute.xlu0 %546
    %v549 = vmul.f32 %v542, %v547
    %551 = vrot.lane.b32.xlu0 %v549, 96
    %v552 = vpop.permute.xlu0 %551
    %v554 = vadd.f32 %v544, %v552
    %v555 = vtanh.pop %v554
    %557 = vrot.lane.b32.xlu0 %v555, 64
    %v558 = vpop.permute.xlu0 %557
    %v560 = vmul.f32 %v542, %v558
    %562 = vrot.lane.b32.xlu0 %v560, 64
    %v563 = vpop.permute.xlu0 %562
    %v564 = vsel %vm56, %v563, 0
    %566 = vmatpush.msra.mxu0 0.0
    %567 = vmatpush.msra.mxu0 0.0
    %568 = vmatpush.msra.mxu0 0.0
    %569 = vmatpush.msra.mxu0 0.0
    %570 = vmatpush.msra.mxu0 0.0
    %571 = vmatpush.msra.mxu0 0.0
    %572 = vmatpush.msra.mxu0 0.0
    %573 = vmatpush.msra.mxu0 0.0
    %574 = vmatpush.msra.mxu0 0.0
    %575 = vmatpush.msra.mxu0 0.0
    %576 = vmatpush.msra.mxu0 0.0
    %577 = vmatpush.msra.mxu0 0.0
    %578 = vmatpush.msra.mxu0 %v44
    %579 = vmatpush.msra.mxu0 %v43
    %580 = vmatpush.msra.mxu0 %v42
    %581 = vmatpush.msra.mxu0 %v41
    %582 = vmatmul.f32.gmra.mxu0 %v564
    %v583 = vpop.f32.mrf.mxu0
    %v584 = vadd.f32 0.0, %v583
    %585 = vdwg.mxu0
    %v586 = vadd.f32 %v120, %v584
    %v587 = vxor.u32 %v586, 2147483648
    %v588 = vmul.f32 %v587, 1.442695
    %v589 = vpow.pop %v588
    %v590 = vadd.f32 %v589, 1.0
    %v591 = vrcp.pop %v590
    %v592 = vmul.f32 %v590, %v591
    %v593 = vsub.f32 1.0, %v592
    %v594 = vmul.f32 %v591, %v593
    %v595 = vadd.f32 %v591, %v594
    %vm596 = vweird.f32 %v590
    %vm597 = vweird.f32 %v591
    %vm598 = vmor %vm596, %vm597
    %v599 = vsel %vm598, %v591, %v595
    %v600 = vand.u32 2147483647, %v590
    %vm601 = vcmp.eq.f32.partialorder %v600, 8.507059e+37
    %v602 = vand.u32 %v590, 2147483648
    %v603 = vor.u32 1.1754944e-38, %v602
    %v604 = vsel %vm601, %v603, %v599
    %v605 = vmul.f32 1.0, %v604
    %v606 = vtanh.pop %v586
    %v607 = vmul.f32 %v605, %v554
    %609 = vrot.lane.b32.xlu0 %v606, 64
    %v610 = vpop.permute.xlu0 %609
    %v612 = vmul.f32 %v605, %v610
    %614 = vrot.lane.b32.xlu0 %v612, 96
    %v615 = vpop.permute.xlu0 %614
    %v617 = vadd.f32 %v607, %v615
    %v618 = vtanh.pop %v617
    %620 = vrot.lane.b32.xlu0 %v618, 64
    %v621 = vpop.permute.xlu0 %620
    %v623 = vmul.f32 %v605, %v621
    %vm624 = vcmask 130048
    %v626 = vsel %vm624, %v36, 0
    %628 = vmatpush.msra.mxu0 0.0
    %629 = vmatpush.msra.mxu0 0.0
    %630 = vmatpush.msra.mxu0 0.0
    %631 = vmatpush.msra.mxu0 0.0
    %632 = vmatpush.msra.mxu0 0.0
    %633 = vmatpush.msra.mxu0 0.0
    %634 = vmatpush.msra.mxu0 0.0
    %635 = vmatpush.msra.mxu0 0.0
    %636 = vmatpush.msra.mxu0 0.0
    %637 = vmatpush.msra.mxu0 0.0
    %638 = vmatpush.msra.mxu0 0.0
    %639 = vmatpush.msra.mxu0 0.0
    %640 = vmatpush.msra.mxu0 0.0
    %641 = vmatpush.msra.mxu0 0.0
    %642 = vmatpush.msra.mxu0 %v47
    %643 = vmatpush.msra.mxu0 %v46
    %644 = vmatmul.f32.gmra.mxu0 %v626
    %v645 = vpop.f32.mrf.mxu0
    %v646 = vadd.f32 0.0, %v645
    %647 = vdwg.mxu0
    %648 = vmatpush.xpose.msra.mxu0 0.0
    %649 = vmatpush.xpose.msra.mxu0 0.0
    %650 = vmatpush.xpose.msra.mxu0 0.0
    %651 = vmatpush.xpose.msra.mxu0 0.0
    %652 = vmatpush.xpose.msra.mxu0 0.0
    %653 = vmatpush.xpose.msra.mxu0 0.0
    %654 = vmatpush.xpose.msra.mxu0 0.0
    %655 = vmatpush.xpose.msra.mxu0 0.0
    %656 = vmatpush.xpose.msra.mxu0 0.0
    %657 = vmatpush.xpose.msra.mxu0 0.0
    %658 = vmatpush.xpose.msra.mxu0 0.0
    %659 = vmatpush.xpose.msra.mxu0 0.0
    %660 = vmatpush.xpose.msra.mxu0 0.0
    %661 = vmatpush.xpose.msra.mxu0 0.0
    %662 = vmatpush.xpose.msra.mxu0 0.0
    %663 = vmatpush.xpose.msra.mxu0 %v52
    %664 = vmatmul.f32.gmra.mxu0 %v646
    %v665 = vpop.f32.mrf.mxu0
    %v666 = vadd.f32 0.0, %v665
    %667 = vdwg.mxu0
    %v669 = vrot.slane %v52, 4
    %671 = vmatpush.xpose.msra.mxu0 0.0
    %672 = vmatpush.xpose.msra.mxu0 0.0
    %673 = vmatpush.xpose.msra.mxu0 0.0
    %674 = vmatpush.xpose.msra.mxu0 0.0
    %675 = vmatpush.xpose.msra.mxu0 0.0
    %676 = vmatpush.xpose.msra.mxu0 0.0
    %677 = vmatpush.xpose.msra.mxu0 0.0
    %678 = vmatpush.xpose.msra.mxu0 0.0
    %679 = vmatpush.xpose.msra.mxu0 0.0
    %680 = vmatpush.xpose.msra.mxu0 0.0
    %681 = vmatpush.xpose.msra.mxu0 0.0
    %682 = vmatpush.xpose.msra.mxu0 0.0
    %683 = vmatpush.xpose.msra.mxu0 0.0
    %684 = vmatpush.xpose.msra.mxu0 0.0
    %685 = vmatpush.xpose.msra.mxu0 0.0
    %686 = vmatpush.xpose.msra.mxu0 %v646
    %687 = vmatmul.f32.gmra.mxu0 %v669
    %v688 = vpop.f32.mrf.mxu0
    %v689 = vadd.f32 0.0, %v688
    %690 = vdwg.mxu0
    %692 = vset.pattern.permute.xlu0 0
    %693 = vperm.xlu0 %692, %v666
    %v694 = vpop.permute.xlu0 %693
    %v696 = vperm.slane %v689, 0
    %v697 = vadd.f32 %v694, %v696
    %vm698 = vcmp.ge.f32.partialorder %v697, 0.0
    %v699 = vmul.f32 %v697, 0.01
    %v700 = vsel %vm698, %v697, %v699
    %v701 = vadd.f32 %v700, %v54
    %vm702 = vcmask 64512
    %v703 = vsel %vm702, %v701, -inf
    %704 = vmax.xlane.f32.xlu0 %v703
    %v705 = vpop.xlane.xlu0 %704
    %v706 = vsub.f32 %v701, %v705
    %v707 = vmul.f32 %v706, 1.442695
    %v708 = vpow.pop %v707
    %v709 = vsel %vm702, %v708, 0.0
    %710 = vadd.xlane.f32.xlu0 %v709
    %v711 = vpop.xlane.xlu0 %710
    %v712 = vrcp.pop %v711
    %v713 = vmul.f32 %v708, %v712
    %714 = vset.pattern.permute.xlu0 1
    %715 = vperm.xlu0 %714, %v666
    %v716 = vpop.permute.xlu0 %715
    %v718 = vperm.slane %v689, 1
    %v719 = vadd.f32 %v716, %v718
    %vm720 = vcmp.ge.f32.partialorder %v719, 0.0
    %v721 = vmul.f32 %v719, 0.01
    %v722 = vsel %vm720, %v719, %v721
    %v723 = vadd.f32 %v722, %v54
    %v724 = vsel %vm702, %v723, -inf
    %725 = vmax.xlane.f32.xlu0 %v724
    %v726 = vpop.xlane.xlu0 %725
    %v727 = vsub.f32 %v723, %v726
    %v728 = vmul.f32 %v727, 1.442695
    %v729 = vpow.pop %v728
    %v730 = vsel %vm702, %v729, 0.0
    %731 = vadd.xlane.f32.xlu0 %v730
    %v732 = vpop.xlane.xlu0 %731
    %v733 = vrcp.pop %v732
    %v734 = vmul.f32 %v729, %v733
    %736 = vrot.lane.b32.xlu0 %v646, 96
    %v737 = vpop.permute.xlu0 %736
    %v740 = vsel %vm702, %v734, 0
    %742 = vmatpush.msra.mxu0 0.0
    %743 = vmatpush.msra.mxu0 0.0
    %744 = vmatpush.msra.mxu0 0.0
    %745 = vmatpush.msra.mxu0 0.0
    %746 = vmatpush.msra.mxu0 0.0
    %747 = vmatpush.msra.mxu0 0.0
    %748 = vmatpush.msra.mxu0 0.0
    %749 = vmatpush.msra.mxu0 0.0
    %750 = vmatpush.msra.mxu0 0.0
    %751 = vmatpush.msra.mxu0 0.0
    %752 = vmatpush.msra.mxu0 0.0
    %753 = vmatpush.msra.mxu0 0.0
    %754 = vmatpush.msra.mxu0 0.0
    %755 = vmatpush.msra.mxu0 0.0
    %756 = vmatpush.msra.mxu0 0.0
    %757 = vmatpush.msra.mxu0 %v737
    %758 = vmatmul.f32.gmra.mxu0 %v740
    %v759 = vpop.f32.mrf.mxu0
    %v760 = vadd.f32 0.0, %v759
    %761 = vdwg.mxu0
    %v763 = vsel %vm702, %v713, 0
    %765 = vmatpush.msra.mxu0 0.0
    %766 = vmatpush.msra.mxu0 0.0
    %767 = vmatpush.msra.mxu0 0.0
    %768 = vmatpush.msra.mxu0 0.0
    %769 = vmatpush.msra.mxu0 0.0
    %770 = vmatpush.msra.mxu0 0.0
    %771 = vmatpush.msra.mxu0 0.0
    %772 = vmatpush.msra.mxu0 0.0
    %773 = vmatpush.msra.mxu0 0.0
    %774 = vmatpush.msra.mxu0 0.0
    %775 = vmatpush.msra.mxu0 0.0
    %776 = vmatpush.msra.mxu0 0.0
    %777 = vmatpush.msra.mxu0 0.0
    %778 = vmatpush.msra.mxu0 0.0
    %779 = vmatpush.msra.mxu0 0.0
    %780 = vmatpush.msra.mxu0 %v646
    %781 = vmatmul.f32.gmra.mxu0 %v763
    %v782 = vpop.f32.mrf.mxu0
    %v783 = vadd.f32 %v760, %v782
    %784 = vdwg.mxu0
    %785 = vset.pattern.permute.xlu0 2
    %786 = vperm.xlu0 %785, %v666
    %v787 = vpop.permute.xlu0 %786
    %v789 = vperm.slane %v689, 2
    %v790 = vadd.f32 %v787, %v789
    %vm791 = vcmp.ge.f32.partialorder %v790, 0.0
    %v792 = vmul.f32 %v790, 0.01
    %v793 = vsel %vm791, %v790, %v792
    %v794 = vadd.f32 %v793, %v54
    %v795 = vsel %vm702, %v794, -inf
    %796 = vmax.xlane.f32.xlu0 %v795
    %v797 = vpop.xlane.xlu0 %796
    %v798 = vsub.f32 %v794, %v797
    %v799 = vmul.f32 %v798, 1.442695
    %v800 = vpow.pop %v799
    %v801 = vsel %vm702, %v800, 0.0
    %802 = vadd.xlane.f32.xlu0 %v801
    %v803 = vpop.xlane.xlu0 %802
    %v804 = vrcp.pop %v803
    %v805 = vmul.f32 %v800, %v804
    %806 = vrot.lane.b32.xlu0 %v646, 64
    %v807 = vpop.permute.xlu0 %806
    %v810 = vsel %vm702, %v805, 0
    %812 = vmatpush.msra.mxu0 0.0
    %813 = vmatpush.msra.mxu0 0.0
    %814 = vmatpush.msra.mxu0 0.0
    %815 = vmatpush.msra.mxu0 0.0
    %816 = vmatpush.msra.mxu0 0.0
    %817 = vmatpush.msra.mxu0 0.0
    %818 = vmatpush.msra.mxu0 0.0
    %819 = vmatpush.msra.mxu0 0.0
    %820 = vmatpush.msra.mxu0 0.0
    %821 = vmatpush.msra.mxu0 0.0
    %822 = vmatpush.msra.mxu0 0.0
    %823 = vmatpush.msra.mxu0 0.0
    %824 = vmatpush.msra.mxu0 0.0
    %825 = vmatpush.msra.mxu0 0.0
    %826 = vmatpush.msra.mxu0 0.0
    %827 = vmatpush.msra.mxu0 %v807
    %828 = vmatmul.f32.gmra.mxu0 %v810
    %v829 = vpop.f32.mrf.mxu0
    %v830 = vadd.f32 0.0, %v829
    %831 = vdwg.mxu0
    %v832 = vadd.f32 %v783, %v830
    %833 = vset.pattern.permute.xlu0 3
    %834 = vperm.xlu0 %833, %v666
    %v835 = vpop.permute.xlu0 %834
    %v837 = vperm.slane %v689, 3
    %v838 = vadd.f32 %v835, %v837
    %vm839 = vcmp.ge.f32.partialorder %v838, 0.0
    %v840 = vmul.f32 %v838, 0.01
    %v841 = vsel %vm839, %v838, %v840
    %v842 = vadd.f32 %v841, %v54
    %v843 = vsel %vm702, %v842, -inf
    %844 = vmax.xlane.f32.xlu0 %v843
    %v845 = vpop.xlane.xlu0 %844
    %v846 = vsub.f32 %v842, %v845
    %v847 = vmul.f32 %v846, 1.442695
    %v848 = vpow.pop %v847
    %v849 = vsel %vm702, %v848, 0.0
    %850 = vadd.xlane.f32.xlu0 %v849
    %v851 = vpop.xlane.xlu0 %850
    %v852 = vrcp.pop %v851
    %v853 = vmul.f32 %v848, %v852
    %854 = vrot.lane.b32.xlu0 %v646, 32
    %v855 = vpop.permute.xlu0 %854
    %v858 = vsel %vm702, %v853, 0
    %860 = vmatpush.msra.mxu0 0.0
    %861 = vmatpush.msra.mxu0 0.0
    %862 = vmatpush.msra.mxu0 0.0
    %863 = vmatpush.msra.mxu0 0.0
    %864 = vmatpush.msra.mxu0 0.0
    %865 = vmatpush.msra.mxu0 0.0
    %866 = vmatpush.msra.mxu0 0.0
    %867 = vmatpush.msra.mxu0 0.0
    %868 = vmatpush.msra.mxu0 0.0
    %869 = vmatpush.msra.mxu0 0.0
    %870 = vmatpush.msra.mxu0 0.0
    %871 = vmatpush.msra.mxu0 0.0
    %872 = vmatpush.msra.mxu0 0.0
    %873 = vmatpush.msra.mxu0 0.0
    %874 = vmatpush.msra.mxu0 0.0
    %875 = vmatpush.msra.mxu0 %v855
    %876 = vmatmul.f32.gmra.mxu0 %v858
    %v877 = vpop.f32.mrf.mxu0
    %v878 = vadd.f32 0.0, %v877
    %879 = vdwg.mxu0
    %v880 = vadd.f32 %v832, %v878
    %v881 = vmul.f32 %v880, 0.25
    %v882 = vtanh.pop %v881
    %v884 = vsel %vm56, %v882, 0
    %886 = vmatpush.msra.mxu0 0.0
    %887 = vmatpush.msra.mxu0 0.0
    %888 = vmatpush.msra.mxu0 0.0
    %889 = vmatpush.msra.mxu0 0.0
    %890 = vmatpush.msra.mxu0 0.0
    %891 = vmatpush.msra.mxu0 0.0
    %892 = vmatpush.msra.mxu0 0.0
    %893 = vmatpush.msra.mxu0 0.0
    %894 = vmatpush.msra.mxu0 0.0
    %895 = vmatpush.msra.mxu0 0.0
    %896 = vmatpush.msra.mxu0 0.0
    %897 = vmatpush.msra.mxu0 0.0
    %898 = vmatpush.msra.mxu0 %v51
    %899 = vmatpush.msra.mxu0 %v50
    %900 = vmatpush.msra.mxu0 %v49
    %901 = vmatpush.msra.mxu0 %v48
    %902 = vmatmul.f32.gmra.mxu0 %v884
    %v903 = vpop.f32.mrf.mxu0
    %v904 = vadd.f32 0.0, %v903
    %905 = vdwg.mxu0
    %906 = vmatpush.xpose.msra.mxu0 0.0
    %907 = vmatpush.xpose.msra.mxu0 0.0
    %908 = vmatpush.xpose.msra.mxu0 0.0
    %909 = vmatpush.xpose.msra.mxu0 0.0
    %910 = vmatpush.xpose.msra.mxu0 0.0
    %911 = vmatpush.xpose.msra.mxu0 0.0
    %912 = vmatpush.xpose.msra.mxu0 0.0
    %913 = vmatpush.xpose.msra.mxu0 0.0
    %914 = vmatpush.xpose.msra.mxu0 0.0
    %915 = vmatpush.xpose.msra.mxu0 0.0
    %916 = vmatpush.xpose.msra.mxu0 0.0
    %917 = vmatpush.xpose.msra.mxu0 0.0
    %918 = vmatpush.xpose.msra.mxu0 0.0
    %919 = vmatpush.xpose.msra.mxu0 0.0
    %920 = vmatpush.xpose.msra.mxu0 0.0
    %921 = vmatpush.xpose.msra.mxu0 %v53
    %922 = vmatmul.f32.gmra.mxu0 %v904
    %v923 = vpop.f32.mrf.mxu0
    %v924 = vadd.f32 0.0, %v923
    %925 = vdwg.mxu0
    %v927 = vrot.slane %v53, 4
    %929 = vmatpush.xpose.msra.mxu0 0.0
    %930 = vmatpush.xpose.msra.mxu0 0.0
    %931 = vmatpush.xpose.msra.mxu0 0.0
    %932 = vmatpush.xpose.msra.mxu0 0.0
    %933 = vmatpush.xpose.msra.mxu0 0.0
    %934 = vmatpush.xpose.msra.mxu0 0.0
    %935 = vmatpush.xpose.msra.mxu0 0.0
    %936 = vmatpush.xpose.msra.mxu0 0.0
    %937 = vmatpush.xpose.msra.mxu0 0.0
    %938 = vmatpush.xpose.msra.mxu0 0.0
    %939 = vmatpush.xpose.msra.mxu0 0.0
    %940 = vmatpush.xpose.msra.mxu0 0.0
    %941 = vmatpush.xpose.msra.mxu0 0.0
    %942 = vmatpush.xpose.msra.mxu0 0.0
    %943 = vmatpush.xpose.msra.mxu0 0.0
    %944 = vmatpush.xpose.msra.mxu0 %v904
    %945 = vmatmul.f32.gmra.mxu0 %v927
    %v946 = vpop.f32.mrf.mxu0
    %v947 = vadd.f32 0.0, %v946
    %948 = vdwg.mxu0
    %950 = vset.pattern.permute.xlu0 0
    %951 = vperm.xlu0 %950, %v924
    %v952 = vpop.permute.xlu0 %951
    %v954 = vperm.slane %v947, 0
    %v955 = vadd.f32 %v952, %v954
    %vm956 = vcmp.ge.f32.partialorder %v955, 0.0
    %v957 = vmul.f32 %v955, 0.01
    %v958 = vsel %vm956, %v955, %v957
    %v959 = vadd.f32 %v958, %v54
    %v960 = vsel %vm702, %v959, -inf
    %961 = vmax.xlane.f32.xlu0 %v960
    %v962 = vpop.xlane.xlu0 %961
    %v963 = vsub.f32 %v959, %v962
    %v964 = vmul.f32 %v963, 1.442695
    %v965 = vpow.pop %v964
    %v966 = vsel %vm702, %v965, 0.0
    %967 = vadd.xlane.f32.xlu0 %v966
    %v968 = vpop.xlane.xlu0 %967
    %v969 = vrcp.pop %v968
    %v970 = vmul.f32 %v965, %v969
    %971 = vset.pattern.permute.xlu0 1
    %972 = vperm.xlu0 %971, %v924
    %v973 = vpop.permute.xlu0 %972
    %v975 = vperm.slane %v947, 1
    %v976 = vadd.f32 %v973, %v975
    %vm977 = vcmp.ge.f32.partialorder %v976, 0.0
    %v978 = vmul.f32 %v976, 0.01
    %v979 = vsel %vm977, %v976, %v978
    %v980 = vadd.f32 %v979, %v54
    %v981 = vsel %vm702, %v980, -inf
    %982 = vmax.xlane.f32.xlu0 %v981
    %v983 = vpop.xlane.xlu0 %982
    %v984 = vsub.f32 %v980, %v983
    %v985 = vmul.f32 %v984, 1.442695
    %v986 = vpow.pop %v985
    %v987 = vsel %vm702, %v986, 0.0
    %988 = vadd.xlane.f32.xlu0 %v987
    %v989 = vpop.xlane.xlu0 %988
    %v990 = vrcp.pop %v989
    %v991 = vmul.f32 %v986, %v990
    %993 = vrot.lane.b32.xlu0 %v904, 96
    %v994 = vpop.permute.xlu0 %993
    %v997 = vsel %vm702, %v991, 0
    %999 = vmatpush.msra.mxu0 0.0
    %1000 = vmatpush.msra.mxu0 0.0
    %1001 = vmatpush.msra.mxu0 0.0
    %1002 = vmatpush.msra.mxu0 0.0
    %1003 = vmatpush.msra.mxu0 0.0
    %1004 = vmatpush.msra.mxu0 0.0
    %1005 = vmatpush.msra.mxu0 0.0
    %1006 = vmatpush.msra.mxu0 0.0
    %1007 = vmatpush.msra.mxu0 0.0
    %1008 = vmatpush.msra.mxu0 0.0
    %1009 = vmatpush.msra.mxu0 0.0
    %1010 = vmatpush.msra.mxu0 0.0
    %1011 = vmatpush.msra.mxu0 0.0
    %1012 = vmatpush.msra.mxu0 0.0
    %1013 = vmatpush.msra.mxu0 0.0
    %1014 = vmatpush.msra.mxu0 %v994
    %1015 = vmatmul.f32.gmra.mxu0 %v997
    %v1016 = vpop.f32.mrf.mxu0
    %v1017 = vadd.f32 0.0, %v1016
    %1018 = vdwg.mxu0
    %v1020 = vsel %vm702, %v970, 0
    %1022 = vmatpush.msra.mxu0 0.0
    %1023 = vmatpush.msra.mxu0 0.0
    %1024 = vmatpush.msra.mxu0 0.0
    %1025 = vmatpush.msra.mxu0 0.0
    %1026 = vmatpush.msra.mxu0 0.0
    %1027 = vmatpush.msra.mxu0 0.0
    %1028 = vmatpush.msra.mxu0 0.0
    %1029 = vmatpush.msra.mxu0 0.0
    %1030 = vmatpush.msra.mxu0 0.0
    %1031 = vmatpush.msra.mxu0 0.0
    %1032 = vmatpush.msra.mxu0 0.0
    %1033 = vmatpush.msra.mxu0 0.0
    %1034 = vmatpush.msra.mxu0 0.0
    %1035 = vmatpush.msra.mxu0 0.0
    %1036 = vmatpush.msra.mxu0 0.0
    %1037 = vmatpush.msra.mxu0 %v904
    %1038 = vmatmul.f32.gmra.mxu0 %v1020
    %v1039 = vpop.f32.mrf.mxu0
    %v1040 = vadd.f32 %v1017, %v1039
    %1041 = vdwg.mxu0
    %1042 = vset.pattern.permute.xlu0 2
    %1043 = vperm.xlu0 %1042, %v924
    %v1044 = vpop.permute.xlu0 %1043
    %v1046 = vperm.slane %v947, 2
    %v1047 = vadd.f32 %v1044, %v1046
    %vm1048 = vcmp.ge.f32.partialorder %v1047, 0.0
    %v1049 = vmul.f32 %v1047, 0.01
    %v1050 = vsel %vm1048, %v1047, %v1049
    %v1051 = vadd.f32 %v1050, %v54
    %v1052 = vsel %vm702, %v1051, -inf
    %1053 = vmax.xlane.f32.xlu0 %v1052
    %v1054 = vpop.xlane.xlu0 %1053
    %v1055 = vsub.f32 %v1051, %v1054
    %v1056 = vmul.f32 %v1055, 1.442695
    %v1057 = vpow.pop %v1056
    %v1058 = vsel %vm702, %v1057, 0.0
    %1059 = vadd.xlane.f32.xlu0 %v1058
    %v1060 = vpop.xlane.xlu0 %1059
    %v1061 = vrcp.pop %v1060
    %v1062 = vmul.f32 %v1057, %v1061
    %1063 = vrot.lane.b32.xlu0 %v904, 64
    %v1064 = vpop.permute.xlu0 %1063
    %v1067 = vsel %vm702, %v1062, 0
    %1069 = vmatpush.msra.mxu0 0.0
    %1070 = vmatpush.msra.mxu0 0.0
    %1071 = vmatpush.msra.mxu0 0.0
    %1072 = vmatpush.msra.mxu0 0.0
    %1073 = vmatpush.msra.mxu0 0.0
    %1074 = vmatpush.msra.mxu0 0.0
    %1075 = vmatpush.msra.mxu0 0.0
    %1076 = vmatpush.msra.mxu0 0.0
    %1077 = vmatpush.msra.mxu0 0.0
    %1078 = vmatpush.msra.mxu0 0.0
    %1079 = vmatpush.msra.mxu0 0.0
    %1080 = vmatpush.msra.mxu0 0.0
    %1081 = vmatpush.msra.mxu0 0.0
    %1082 = vmatpush.msra.mxu0 0.0
    %1083 = vmatpush.msra.mxu0 0.0
    %1084 = vmatpush.msra.mxu0 %v1064
    %1085 = vmatmul.f32.gmra.mxu0 %v1067
    %v1086 = vpop.f32.mrf.mxu0
    %v1087 = vadd.f32 0.0, %v1086
    %1088 = vdwg.mxu0
    %v1089 = vadd.f32 %v1040, %v1087
    %1090 = vset.pattern.permute.xlu0 3
    %1091 = vperm.xlu0 %1090, %v924
    %v1092 = vpop.permute.xlu0 %1091
    %v1094 = vperm.slane %v947, 3
    %v1095 = vadd.f32 %v1092, %v1094
    %vm1096 = vcmp.ge.f32.partialorder %v1095, 0.0
    %v1097 = vmul.f32 %v1095, 0.01
    %v1098 = vsel %vm1096, %v1095, %v1097
    %v1099 = vadd.f32 %v1098, %v54
    %v1100 = vsel %vm702, %v1099, -inf
    %1101 = vmax.xlane.f32.xlu0 %v1100
    %v1102 = vpop.xlane.xlu0 %1101
    %v1103 = vsub.f32 %v1099, %v1102
    %v1104 = vmul.f32 %v1103, 1.442695
    %v1105 = vpow.pop %v1104
    %v1106 = vsel %vm702, %v1105, 0.0
    %1107 = vadd.xlane.f32.xlu0 %v1106
    %v1108 = vpop.xlane.xlu0 %1107
    %v1109 = vrcp.pop %v1108
    %v1110 = vmul.f32 %v1105, %v1109
    %1111 = vrot.lane.b32.xlu0 %v904, 32
    %v1112 = vpop.permute.xlu0 %1111
    %v1115 = vsel %vm702, %v1110, 0
    %1117 = vmatpush.msra.mxu0 0.0
    %1118 = vmatpush.msra.mxu0 0.0
    %1119 = vmatpush.msra.mxu0 0.0
    %1120 = vmatpush.msra.mxu0 0.0
    %1121 = vmatpush.msra.mxu0 0.0
    %1122 = vmatpush.msra.mxu0 0.0
    %1123 = vmatpush.msra.mxu0 0.0
    %1124 = vmatpush.msra.mxu0 0.0
    %1125 = vmatpush.msra.mxu0 0.0
    %1126 = vmatpush.msra.mxu0 0.0
    %1127 = vmatpush.msra.mxu0 0.0
    %1128 = vmatpush.msra.mxu0 0.0
    %1129 = vmatpush.msra.mxu0 0.0
    %1130 = vmatpush.msra.mxu0 0.0
    %1131 = vmatpush.msra.mxu0 0.0
    %1132 = vmatpush.msra.mxu0 %v1112
    %1133 = vmatmul.f32.gmra.mxu0 %v1115
    %v1134 = vpop.f32.mrf.mxu0
    %v1135 = vadd.f32 0.0, %v1134
    %1136 = vdwg.mxu0
    %v1137 = vadd.f32 %v1089, %v1135
    %v1138 = vmul.f32 %v1137, 0.25
    %v1139 = vtanh.pop %v1138
    %1141 = vrot.lane.b32.xlu0 %v623, 64
    %v1142 = vpop.permute.xlu0 %1141
    %v1143 = vsel %vm56, %v1142, 0
    %v1146 = vsel %vm56, %v1139, 0
    %1148 = vmatpush.xpose.msra.mxu0 0.0
    %1149 = vmatpush.xpose.msra.mxu0 0.0
    %1150 = vmatpush.xpose.msra.mxu0 0.0
    %1151 = vmatpush.xpose.msra.mxu0 0.0
    %1152 = vmatpush.xpose.msra.mxu0 0.0
    %1153 = vmatpush.xpose.msra.mxu0 0.0
    %1154 = vmatpush.xpose.msra.mxu0 0.0
    %1155 = vmatpush.xpose.msra.mxu0 0.0
    %1156 = vmatpush.xpose.msra.mxu0 0.0
    %1157 = vmatpush.xpose.msra.mxu0 0.0
    %1158 = vmatpush.xpose.msra.mxu0 0.0
    %1159 = vmatpush.xpose.msra.mxu0 0.0
    %1160 = vmatpush.xpose.msra.mxu0 0.0
    %1161 = vmatpush.xpose.msra.mxu0 0.0
    %1162 = vmatpush.xpose.msra.mxu0 0.0
    %1163 = vmatpush.xpose.msra.mxu0 %v1146
    %1164 = vmatmul.f32.gmra.mxu0 %v1143
    %v1165 = vpop.f32.mrf.mxu0
    %v1166 = vadd.f32 0.0, %v1165
    %1167 = vdwg.mxu0
    %1168 = vst.msk [vmem:[#allocation5] sm:$0xff] %vm702, %v1166
    // Predicated region
    $region14: #{tpu_custom_call.1} parent=1 // pred_check
      _
    $region15: #{tpu_custom_call.1} parent=1 // pred_check_branch
      %1170 = sbr.rel (0) target = $region17
    $region16: #{tpu_custom_call.1} parent=1 // pred_region
      %1172 = vsyncadd [#allocation4], 0
      %s1174 = sshll.u32 [#allocation5], 4
      %s1175 = int_to_ptr.vmem [resolvable:$true] %s1174
      %s1176 = sshll.u32 %s2, 4
      %s1177 = int_to_ptr.hbm [resolvable:$true] %s1176
      %1179 = dma.vmem_to_hbm [thread:$0]  %s1175, 128, %s1177, [#allocation4]
    $region17: #{tpu_custom_call.1} parent=1 // pred_fallthru
      _
    // Predicated region
    $region18: #{tpu_custom_call.1} parent=1 // pred_check
      _
    $region19: #{tpu_custom_call.1} parent=1 // pred_check_branch
      %1181 = sbr.rel (0) target = $region21
    $region20: #{tpu_custom_call.1} parent=1 // pred_region
      %1183 = dma.done [#allocation4], 128
    $region21: #{tpu_custom_call.1} parent=1 // pred_fallthru
      _
    %1184 = vsyncpa [#allocation3], 1
    %1185 = vsyncpa [#allocation4], 1

</llo_original>
